<compile_context>
chip_gen: v5e
topology: v5e:2x2
jax: 0.10.0
libtpu: 0.0.40
codegen_flags: <defaults>
</compile_context>

<pallas_src>
import functools
import numpy as np
import jax
import jax.numpy as jnp
from jax.experimental import pallas as pl
from jax.experimental.pallas import tpu as pltpu

WIN_SIZE = 11        # pytorch_msssim defaults
WIN_SIGMA = 1.5
_K1, _K2 = 0.01, 0.03
_DATA_RANGE = 1.0


def _gauss_1d(size, sigma):
    coords = np.arange(size, dtype=np.float64) - size // 2
    g = np.exp(-(coords ** 2) / (2.0 * sigma ** 2))
    return (g / g.sum()).astype(np.float32)


def _band_matrix(length, g):
    """M such that (x @ M)[o] = sum_k g[k] * x[o + k]  (valid cross-correlation)."""
    win = g.shape[0]
    out_len = length - win + 1
    m = np.zeros((length, out_len), dtype=np.float32)
    for o in range(out_len):
        m[o:o + win, o] = g
    return m


def _pick_channels_per_step(b, h, w, oh, ow_pad):
    """Channels per grid step: >= ~512 stacked sublane rows (MXU fill) while keeping the
    per-step f32 working set ~<= 8 MiB; must divide b; <= 16 to bound in-kernel unroll."""
    per_chan = 4 * (6 * h * w + 8 * h * ow_pad + 12 * oh * ow_pad)
    cap = min(b,
              max(1, (8 * 1024 * 1024) // max(per_chan, 1)),
              max(1, 1024 // (4 * h)),
              16)
    for cb in range(int(cap), 0, -1):
        if b % cb == 0:
            return cb
    return 1


def _vmem_limit_bytes(cb, h, w, oh, ow_pad, in_itemsize):
    g = 4 * cb
    need = (2 * 2 * cb * h * w * in_itemsize                    # double-buffered inputs
            + 2 * 4 * (w * ow_pad + oh * h)                     # double-buffered conv mats
            + 2 * 4 * 8 * 128                                   # output partial blocks
            + 4 * (3 * cb * h * w + g * h * w + 2 * g * h * ow_pad
                   + g * oh * ow_pad + 12 * cb * oh * ow_pad))  # in-kernel temporaries
    # >= the old 32 MiB floor, <= 48 MiB so it stays inside v7x's 64 MiB physical VMEM.
    return int(min(48 * 1024 * 1024, max(32 * 1024 * 1024, 2 * need)))


def _combo_loss_kernel(logits_ref, targets_ref, mw_ref, mht_ref, out_ref, *, ow):
    cb, h, w = logits_ref.shape
    oh = mht_ref.shape[0]
    ow_pad = mw_ref.shape[1]
    g = 4 * cb

    x = jax.nn.sigmoid(logits_ref[...].astype(jnp.float32).reshape(cb * h, w))
    y = targets_ref[...].astype(jnp.float32).reshape(cb * h, w)

    # ---------------- Dice partial sums (2 reductions) ----------------
    inter_s = jnp.sum(x * y, keepdims=True)        # (1, 1)
    sum_xy_s = jnp.sum(x + y, keepdims=True)       # (1, 1)

    # ---------------- SSIM: 4 centered filtered maps ----------------
    xc = x - 0.5
    yc = y - 0.5
    p = xc + yc
    m = xc - yc
    stacked = jnp.concatenate([xc, yc, p * p, m * m], axis=0)               # (4*CB*H, W)

    # lane-axis (W -> OW_pad) conv: one MXU matmul for all maps/channels.
    t = jnp.dot(stacked, mw_ref[...], preferred_element_type=jnp.float32)   # (4*CB*H, OWp)

    # row-axis (H -> OH) conv, fused: lane-concat the G (H, OWp) slices (128-aligned)
    # and hit the MXU once with (OH, H) @ (H, G*OWp).
    t_lane = jnp.concatenate([t[q * h:(q + 1) * h, :] for q in range(g)], axis=1)
    u = jnp.dot(mht_ref[...], t_lane, preferred_element_type=jnp.float32)   # (OH, G*OWp)

    cw = cb * ow_pad
    mu1c = u[:, 0 * cw:1 * cw]     # E[x] - 0.5
    mu2c = u[:, 1 * cw:2 * cw]     # E[y] - 0.5
    ep2 = u[:, 2 * cw:3 * cw]      # E[(x'+y')^2]
    em2 = u[:, 3 * cw:4 * cw]      # E[(x'-y')^2]

    m1 = mu1c + 0.5
    m2 = mu2c + 0.5
    s12 = 0.25 * (ep2 - em2) - mu1c * mu2c
    s1s2 = 0.5 * (ep2 + em2) - mu1c * mu1c - mu2c * mu2c

    c1 = (_K1 * _DATA_RANGE) ** 2
    c2 = (_K2 * _DATA_RANGE) ** 2
    num = (2.0 * m1 * m2 + c1) * (2.0 * s12 + c2)
    den = (m1 * m1 + m2 * m2 + c1) * (s1s2 + c2)

    r = pl.reciprocal(den, approx=True)            # EUP vrcp (separate issue slot)
    r = r * (2.0 - den * r)                        # 2 Newton steps on the VPU
    r = r * (2.0 - den * r)
    ssim_map = num * r                             # (OH, CB*OWp)

    # per-channel mean over the OH x OW valid window, relu (nonnegative_ssim), then sum.
    lane = jax.lax.broadcasted_iota(jnp.int32, (oh, ow_pad), 1)
    valid = lane < ow                              # padded cols evaluate to exactly 1.0
    inv_cnt = 1.0 / float(oh * ow)
    ssim_s = jnp.zeros((1, 1), jnp.float32)
    for ch in range(cb):
        blk = ssim_map[:, ch * ow_pad:(ch + 1) * ow_pad]
        cmean = jnp.sum(jnp.where(valid, blk, 0.0), keepdims=True) * inv_cnt
        ssim_s = ssim_s + jnp.maximum(cmean, 0.0)

    # ---------------- lane-dense (8, 128) partial output ----------------
    row_i = jax.lax.broadcasted_iota(jnp.int32, (8, 128), 0)
    lane_i = jax.lax.broadcasted_iota(jnp.int32, (8, 128), 1)
    first = row_i == 0
    out_ref[...] = (jnp.where(first & (lane_i == 0), inter_s, 0.0)
                    + jnp.where(first & (lane_i == 1), sum_xy_s, 0.0)
                    + jnp.where(first & (lane_i == 2), ssim_s, 0.0))


def combo_loss(logits, targets, smooth=1.0):
    n, c, h, w = logits.shape
    assert targets.shape == logits.shape
    assert h >= WIN_SIZE and w >= WIN_SIZE, "SSIM window (11) must fit in H and W"
    b = n * c
    oh, ow = h - WIN_SIZE + 1, w - WIN_SIZE + 1
    ow_pad = ((ow + 127) // 128) * 128

    g1d = _gauss_1d(WIN_SIZE, WIN_SIGMA)
    mw_np = np.zeros((w, ow_pad), dtype=np.float32)
    mw_np[:, :ow] = _band_matrix(w, g1d)
    mw = jnp.asarray(mw_np)                          # (W, OW_pad)  lane conv, zero-padded
    mht = jnp.asarray(_band_matrix(h, g1d).T)        # (OH, H)      row conv

    cb = _pick_channels_per_step(b, h, w, oh, ow_pad)
    steps = b // cb

    # Keep the caller's dtype (bf16 inputs halve the HBM->VMEM DMA); kernel upcasts.
    x3 = logits.reshape(b, h, w)
    y3 = targets.reshape(b, h, w)

    kernel = pl.pallas_call(
        functools.partial(_combo_loss_kernel, ow=ow),
        out_shape=jax.ShapeDtypeStruct((steps * 8, 128), jnp.float32),
        grid=(steps,),
        in_specs=[
            pl.BlockSpec((cb, h, w), lambda i: (i, 0, 0)),   # logits, CB channels per step
            pl.BlockSpec((cb, h, w), lambda i: (i, 0, 0)),   # targets
            pl.BlockSpec((w, ow_pad), lambda i: (0, 0)),     # mw (resident)
            pl.BlockSpec((oh, h), lambda i: (0, 0)),         # mh_t (resident)
        ],
        out_specs=pl.BlockSpec((8, 128), lambda i: (i, 0)),
        compiler_params=pltpu.CompilerParams(
            dimension_semantics=("parallel",),               # no carried state -> 2 TCs ok
            vmem_limit_bytes=_vmem_limit_bytes(cb, h, w, oh, ow_pad, x3.dtype.itemsize),
        ),
    )
    partials = kernel(x3, y3, mw, mht)                       # (steps*8, 128)

    # tiny final combine in the wrapper (sanctioned by the review for the parallel grid)
    totals = jnp.sum(partials, axis=0)                       # (128,)
    inter, sum_xy, ssim_sum = totals[0], totals[1], totals[2]
    dice = (2.0 * inter + smooth) / (sum_xy + smooth)
    ssim_val = ssim_sum / b
    combo = 2.0 - (dice + ssim_val)
    return combo, dice, ssim_val


def _reference(logits, targets, smooth=1.0):
    """Pure-JAX reference mirroring torch.sigmoid + dice + pytorch_msssim.ssim."""
    x = jax.nn.sigmoid(logits.astype(jnp.float32))
    y = targets.astype(jnp.float32)
    inter = jnp.sum(x * y)
    dice = (2.0 * inter + smooth) / (jnp.sum(x) + jnp.sum(y) + smooth)

    n, c, h, w = x.shape
    g = _gauss_1d(WIN_SIZE, WIN_SIGMA)
    mw = jnp.asarray(_band_matrix(w, g))
    mh = jnp.asarray(_band_matrix(h, g))
    hp = jax.lax.Precision.HIGHEST

    def gf(a):
        t = jnp.einsum('nchw,wo->ncho', a, mw, precision=hp)
        return jnp.einsum('ncho,hp->ncpo', t, mh, precision=hp)

    mu1, mu2 = gf(x), gf(y)
    exx, eyy, exy = gf(x * x), gf(y * y), gf(x * y)
    s1, s2, s12 = exx - mu1 ** 2, eyy - mu2 ** 2, exy - mu1 * mu2
    c1, c2 = (_K1 * _DATA_RANGE) ** 2, (_K2 * _DATA_RANGE) ** 2
    cs = (2.0 * s12 + c2) / (s1 + s2 + c2)
    sm = ((2.0 * mu1 * mu2 + c1) / (mu1 ** 2 + mu2 ** 2 + c1)) * cs
    per = jnp.maximum(sm.reshape(n, c, -1).mean(-1), 0.0)
    ssim_val = per.mean()
    return 2.0 - (dice + ssim_val), dice, ssim_val


if __name__ == "__main__":
    key = jax.random.PRNGKey(0)
    k1, k2 = jax.random.split(key)
    n, c, h, w = 2, 4, 16, 16   # spatial must be >= 11 for the SSIM window
    logits = jax.random.normal(k1, (n, c, h, w), dtype=jnp.float32)
    targets = (jax.random.uniform(k2, (n, c, h, w)) > 0.5).astype(jnp.float32)

    combo, dice, ssim_val = combo_loss(logits, targets)
    jax.block_until_ready((combo, dice, ssim_val))

    ref_combo, ref_dice, ref_ssim = _reference(logits, targets)
    # f32 conv path + Newton-refined reciprocal -> tolerances tightened from 2e-3 to 5e-5.
    np.testing.assert_allclose(np.array(dice), np.array(ref_dice), rtol=1e-5, atol=1e-5)
    np.testing.assert_allclose(np.array(ssim_val), np.array(ref_ssim), rtol=5e-5, atol=5e-5)
    np.testing.assert_allclose(np.array(combo), np.array(ref_combo), rtol=5e-5, atol=5e-5)

    print("KERNEL_OK")
</pallas_src>

<mosaic_0001>
module attributes {stable_mosaic.version = 11 : i64} {
  func.func @_combo_loss_kernel(%arg0: i32, %arg1: memref<8x16x16xf32, #tpu.memory_space<vmem>>, %arg2: memref<8x16x16xf32, #tpu.memory_space<vmem>>, %arg3: memref<16x128xf32, #tpu.memory_space<vmem>>, %arg4: memref<6x16xf32, #tpu.memory_space<vmem>>, %arg5: memref<8x128xf32, #tpu.memory_space<vmem>>) attributes {dimension_semantics = [#tpu.dimension_semantics<parallel>], iteration_bounds = array<i64: 1>, scalar_prefetch = 0 : i64, scratch_operands = 0 : i64, tpu.core_type = #tpu.core_type<tc>, window_params = [{transform_indices = @transform_0, window_bounds = array<i64: 8, 16, 16>}, {transform_indices = @transform_1, window_bounds = array<i64: 8, 16, 16>}, {pipeline_mode = #tpu.pipeline_mode<synchronous>, transform_indices = @transform_2, window_bounds = array<i64: 16, 128>}, {pipeline_mode = #tpu.pipeline_mode<synchronous>, transform_indices = @transform_3, window_bounds = array<i64: 6, 16>}, {transform_indices = @transform_4, window_bounds = array<i64: 8, 128>}]} {
    %c0 = arith.constant 0 : index
    %c0_0 = arith.constant 0 : index
    %c0_1 = arith.constant 0 : index
    %0 = vector.load %arg1[%c0, %c0_0, %c0_1] : memref<8x16x16xf32, #tpu.memory_space<vmem>>, vector<8x16x16xf32>
    %1 = vector.shape_cast %0 : vector<8x16x16xf32> to vector<128x16xf32>
    %2 = arith.negf %1 : vector<128x16xf32>
    %3 = math.exp %2 : vector<128x16xf32>
    %cst = arith.constant 1.000000e+00 : f32
    %4 = vector.broadcast %cst : f32 to vector<128x16xf32>
    %5 = arith.addf %4, %3 : vector<128x16xf32>
    %6 = arith.divf %4, %5 : vector<128x16xf32>
    %c0_2 = arith.constant 0 : index
    %c0_3 = arith.constant 0 : index
    %c0_4 = arith.constant 0 : index
    %7 = vector.load %arg2[%c0_2, %c0_3, %c0_4] : memref<8x16x16xf32, #tpu.memory_space<vmem>>, vector<8x16x16xf32>
    %8 = vector.shape_cast %7 : vector<8x16x16xf32> to vector<128x16xf32>
    %9 = arith.mulf %6, %8 : vector<128x16xf32>
    %10 = vector.shape_cast %9 : vector<128x16xf32> to vector<1x128x16xf32>
    %cst_5 = arith.constant dense<0.000000e+00> : vector<1xf32>
    %11 = vector.multi_reduction <add>, %10, %cst_5 [1, 2] : vector<1x128x16xf32> to vector<1xf32>
    %12 = vector.shape_cast %11 : vector<1xf32> to vector<1x1x1xf32>
    %13 = vector.extract %12[0, 0, 0] : f32 from vector<1x1x1xf32>
    %14 = vector.broadcast %13 : f32 to vector<1x1xf32>
    %15 = arith.addf %6, %8 : vector<128x16xf32>
    %16 = vector.shape_cast %15 : vector<128x16xf32> to vector<1x128x16xf32>
    %cst_6 = arith.constant dense<0.000000e+00> : vector<1xf32>
    %17 = vector.multi_reduction <add>, %16, %cst_6 [1, 2] : vector<1x128x16xf32> to vector<1xf32>
    %18 = vector.shape_cast %17 : vector<1xf32> to vector<1x1x1xf32>
    %19 = vector.extract %18[0, 0, 0] : f32 from vector<1x1x1xf32>
    %20 = vector.broadcast %19 : f32 to vector<1x1xf32>
    %cst_7 = arith.constant 5.000000e-01 : f32
    %21 = vector.broadcast %cst_7 : f32 to vector<128x16xf32>
    %22 = arith.subf %6, %21 : vector<128x16xf32>
    %cst_8 = arith.constant 5.000000e-01 : f32
    %23 = vector.broadcast %cst_8 : f32 to vector<128x16xf32>
    %24 = arith.subf %8, %23 : vector<128x16xf32>
    %25 = arith.addf %22, %24 : vector<128x16xf32>
    %26 = arith.subf %22, %24 : vector<128x16xf32>
    %27 = arith.mulf %25, %25 : vector<128x16xf32>
    %28 = arith.mulf %26, %26 : vector<128x16xf32>
    %29 = tpu.concatenate %22, %24, %27, %28 in 0 : vector<128x16xf32>, vector<128x16xf32>, vector<128x16xf32>, vector<128x16xf32> -> vector<512x16xf32>
    %c0_9 = arith.constant 0 : index
    %c0_10 = arith.constant 0 : index
    %30 = vector.load %arg3[%c0_9, %c0_10] : memref<16x128xf32, #tpu.memory_space<vmem>>, vector<16x128xf32>
    %cst_11 = arith.constant dense<0.000000e+00> : vector<512x128xf32>
    %31 = tpu.matmul %29, %30, %cst_11 {dimension_numbers = #tpu.dot_dimension_numbers<[1], [0], [0], [1], [0, 0, 1, 1], [], []>} : vector<512x16xf32>, vector<16x128xf32>, vector<512x128xf32> -> vector<512x128xf32>
    %32 = vector.extract_strided_slice %31 {offsets = [0, 0], sizes = [16, 128], strides = [1, 1]} : vector<512x128xf32> to vector<16x128xf32>
    %33 = vector.extract_strided_slice %31 {offsets = [16, 0], sizes = [16, 128], strides = [1, 1]} : vector<512x128xf32> to vector<16x128xf32>
    %34 = vector.extract_strided_slice %31 {offsets = [32, 0], sizes = [16, 128], strides = [1, 1]} : vector<512x128xf32> to vector<16x128xf32>
    %35 = vector.extract_strided_slice %31 {offsets = [48, 0], sizes = [16, 128], strides = [1, 1]} : vector<512x128xf32> to vector<16x128xf32>
    %36 = vector.extract_strided_slice %31 {offsets = [64, 0], sizes = [16, 128], strides = [1, 1]} : vector<512x128xf32> to vector<16x128xf32>
    %37 = vector.extract_strided_slice %31 {offsets = [80, 0], sizes = [16, 128], strides = [1, 1]} : vector<512x128xf32> to vector<16x128xf32>
    %38 = vector.extract_strided_slice %31 {offsets = [96, 0], sizes = [16, 128], strides = [1, 1]} : vector<512x128xf32> to vector<16x128xf32>
    %39 = vector.extract_strided_slice %31 {offsets = [112, 0], sizes = [16, 128], strides = [1, 1]} : vector<512x128xf32> to vector<16x128xf32>
    %40 = vector.extract_strided_slice %31 {offsets = [128, 0], sizes = [16, 128], strides = [1, 1]} : vector<512x128xf32> to vector<16x128xf32>
    %41 = vector.extract_strided_slice %31 {offsets = [144, 0], sizes = [16, 128], strides = [1, 1]} : vector<512x128xf32> to vector<16x128xf32>
    %42 = vector.extract_strided_slice %31 {offsets = [160, 0], sizes = [16, 128], strides = [1, 1]} : vector<512x128xf32> to vector<16x128xf32>
    %43 = vector.extract_strided_slice %31 {offsets = [176, 0], sizes = [16, 128], strides = [1, 1]} : vector<512x128xf32> to vector<16x128xf32>
    %44 = vector.extract_strided_slice %31 {offsets = [192, 0], sizes = [16, 128], strides = [1, 1]} : vector<512x128xf32> to vector<16x128xf32>
    %45 = vector.extract_strided_slice %31 {offsets = [208, 0], sizes = [16, 128], strides = [1, 1]} : vector<512x128xf32> to vector<16x128xf32>
    %46 = vector.extract_strided_slice %31 {offsets = [224, 0], sizes = [16, 128], strides = [1, 1]} : vector<512x128xf32> to vector<16x128xf32>
    %47 = vector.extract_strided_slice %31 {offsets = [240, 0], sizes = [16, 128], strides = [1, 1]} : vector<512x128xf32> to vector<16x128xf32>
    %48 = vector.extract_strided_slice %31 {offsets = [256, 0], sizes = [16, 128], strides = [1, 1]} : vector<512x128xf32> to vector<16x128xf32>
    %49 = vector.extract_strided_slice %31 {offsets = [272, 0], sizes = [16, 128], strides = [1, 1]} : vector<512x128xf32> to vector<16x128xf32>
    %50 = vector.extract_strided_slice %31 {offsets = [288, 0], sizes = [16, 128], strides = [1, 1]} : vector<512x128xf32> to vector<16x128xf32>
    %51 = vector.extract_strided_slice %31 {offsets = [304, 0], sizes = [16, 128], strides = [1, 1]} : vector<512x128xf32> to vector<16x128xf32>
    %52 = vector.extract_strided_slice %31 {offsets = [320, 0], sizes = [16, 128], strides = [1, 1]} : vector<512x128xf32> to vector<16x128xf32>
    %53 = vector.extract_strided_slice %31 {offsets = [336, 0], sizes = [16, 128], strides = [1, 1]} : vector<512x128xf32> to vector<16x128xf32>
    %54 = vector.extract_strided_slice %31 {offsets = [352, 0], sizes = [16, 128], strides = [1, 1]} : vector<512x128xf32> to vector<16x128xf32>
    %55 = vector.extract_strided_slice %31 {offsets = [368, 0], sizes = [16, 128], strides = [1, 1]} : vector<512x128xf32> to vector<16x128xf32>
    %56 = vector.extract_strided_slice %31 {offsets = [384, 0], sizes = [16, 128], strides = [1, 1]} : vector<512x128xf32> to vector<16x128xf32>
    %57 = vector.extract_strided_slice %31 {offsets = [400, 0], sizes = [16, 128], strides = [1, 1]} : vector<512x128xf32> to vector<16x128xf32>
    %58 = vector.extract_strided_slice %31 {offsets = [416, 0], sizes = [16, 128], strides = [1, 1]} : vector<512x128xf32> to vector<16x128xf32>
    %59 = vector.extract_strided_slice %31 {offsets = [432, 0], sizes = [16, 128], strides = [1, 1]} : vector<512x128xf32> to vector<16x128xf32>
    %60 = vector.extract_strided_slice %31 {offsets = [448, 0], sizes = [16, 128], strides = [1, 1]} : vector<512x128xf32> to vector<16x128xf32>
    %61 = vector.extract_strided_slice %31 {offsets = [464, 0], sizes = [16, 128], strides = [1, 1]} : vector<512x128xf32> to vector<16x128xf32>
    %62 = vector.extract_strided_slice %31 {offsets = [480, 0], sizes = [16, 128], strides = [1, 1]} : vector<512x128xf32> to vector<16x128xf32>
    %63 = vector.extract_strided_slice %31 {offsets = [496, 0], sizes = [16, 128], strides = [1, 1]} : vector<512x128xf32> to vector<16x128xf32>
    %64 = tpu.concatenate %32, %33, %34, %35, %36, %37, %38, %39, %40, %41, %42, %43, %44, %45, %46, %47 in 1 : vector<16x128xf32>, vector<16x128xf32>, vector<16x128xf32>, vector<16x128xf32>, vector<16x128xf32>, vector<16x128xf32>, vector<16x128xf32>, vector<16x128xf32>, vector<16x128xf32>, vector<16x128xf32>, vector<16x128xf32>, vector<16x128xf32>, vector<16x128xf32>, vector<16x128xf32>, vector<16x128xf32>, vector<16x128xf32> -> vector<16x2048xf32>
    %65 = tpu.concatenate %48, %49, %50, %51, %52, %53, %54, %55, %56, %57, %58, %59, %60, %61, %62, %63 in 1 : vector<16x128xf32>, vector<16x128xf32>, vector<16x128xf32>, vector<16x128xf32>, vector<16x128xf32>, vector<16x128xf32>, vector<16x128xf32>, vector<16x128xf32>, vector<16x128xf32>, vector<16x128xf32>, vector<16x128xf32>, vector<16x128xf32>, vector<16x128xf32>, vector<16x128xf32>, vector<16x128xf32>, vector<16x128xf32> -> vector<16x2048xf32>
    %66 = tpu.concatenate %64, %65 in 1 : vector<16x2048xf32>, vector<16x2048xf32> -> vector<16x4096xf32>
    %c0_12 = arith.constant 0 : index
    %c0_13 = arith.constant 0 : index
    %67 = vector.load %arg4[%c0_12, %c0_13] : memref<6x16xf32, #tpu.memory_space<vmem>>, vector<6x16xf32>
    %cst_14 = arith.constant dense<0.000000e+00> : vector<6x4096xf32>
    %68 = tpu.matmul %67, %66, %cst_14 {dimension_numbers = #tpu.dot_dimension_numbers<[1], [0], [0], [1], [0, 0, 1, 1], [], []>} : vector<6x16xf32>, vector<16x4096xf32>, vector<6x4096xf32> -> vector<6x4096xf32>
    %69 = vector.extract_strided_slice %68 {offsets = [0, 0], sizes = [6, 1024], strides = [1, 1]} : vector<6x4096xf32> to vector<6x1024xf32>
    %70 = vector.extract_strided_slice %68 {offsets = [0, 1024], sizes = [6, 1024], strides = [1, 1]} : vector<6x4096xf32> to vector<6x1024xf32>
    %71 = vector.extract_strided_slice %68 {offsets = [0, 2048], sizes = [6, 1024], strides = [1, 1]} : vector<6x4096xf32> to vector<6x1024xf32>
    %72 = vector.extract_strided_slice %68 {offsets = [0, 3072], sizes = [6, 1024], strides = [1, 1]} : vector<6x4096xf32> to vector<6x1024xf32>
    %cst_15 = arith.constant 5.000000e-01 : f32
    %73 = vector.broadcast %cst_15 : f32 to vector<6x1024xf32>
    %74 = arith.addf %69, %73 : vector<6x1024xf32>
    %cst_16 = arith.constant 5.000000e-01 : f32
    %75 = vector.broadcast %cst_16 : f32 to vector<6x1024xf32>
    %76 = arith.addf %70, %75 : vector<6x1024xf32>
    %77 = arith.subf %71, %72 : vector<6x1024xf32>
    %cst_17 = arith.constant 2.500000e-01 : f32
    %78 = vector.broadcast %cst_17 : f32 to vector<6x1024xf32>
    %79 = arith.mulf %78, %77 : vector<6x1024xf32>
    %80 = arith.mulf %69, %70 : vector<6x1024xf32>
    %81 = arith.subf %79, %80 : vector<6x1024xf32>
    %82 = arith.addf %71, %72 : vector<6x1024xf32>
    %cst_18 = arith.constant 5.000000e-01 : f32
    %83 = vector.broadcast %cst_18 : f32 to vector<6x1024xf32>
    %84 = arith.mulf %83, %82 : vector<6x1024xf32>
    %85 = arith.mulf %69, %69 : vector<6x1024xf32>
    %86 = arith.subf %84, %85 : vector<6x1024xf32>
    %87 = arith.mulf %70, %70 : vector<6x1024xf32>
    %88 = arith.subf %86, %87 : vector<6x1024xf32>
    %cst_19 = arith.constant 2.000000e+00 : f32
    %89 = vector.broadcast %cst_19 : f32 to vector<6x1024xf32>
    %90 = arith.mulf %89, %74 : vector<6x1024xf32>
    %91 = arith.mulf %90, %76 : vector<6x1024xf32>
    %cst_20 = arith.constant 9.99999974E-5 : f32
    %92 = vector.broadcast %cst_20 : f32 to vector<6x1024xf32>
    %93 = arith.addf %91, %92 : vector<6x1024xf32>
    %cst_21 = arith.constant 2.000000e+00 : f32
    %94 = vector.broadcast %cst_21 : f32 to vector<6x1024xf32>
    %95 = arith.mulf %94, %81 : vector<6x1024xf32>
    %cst_22 = arith.constant 8.99999984E-4 : f32
    %96 = vector.broadcast %cst_22 : f32 to vector<6x1024xf32>
    %97 = arith.addf %95, %96 : vector<6x1024xf32>
    %98 = arith.mulf %93, %97 : vector<6x1024xf32>
    %99 = arith.mulf %74, %74 : vector<6x1024xf32>
    %100 = arith.mulf %76, %76 : vector<6x1024xf32>
    %101 = arith.addf %99, %100 : vector<6x1024xf32>
    %cst_23 = arith.constant 9.99999974E-5 : f32
    %102 = vector.broadcast %cst_23 : f32 to vector<6x1024xf32>
    %103 = arith.addf %101, %102 : vector<6x1024xf32>
    %cst_24 = arith.constant 8.99999984E-4 : f32
    %104 = vector.broadcast %cst_24 : f32 to vector<6x1024xf32>
    %105 = arith.addf %88, %104 : vector<6x1024xf32>
    %106 = arith.mulf %103, %105 : vector<6x1024xf32>
    %107 = tpu.reciprocal %106 {approx = true} : vector<6x1024xf32> -> vector<6x1024xf32>
    %108 = arith.mulf %106, %107 : vector<6x1024xf32>
    %cst_25 = arith.constant 2.000000e+00 : f32
    %109 = vector.broadcast %cst_25 : f32 to vector<6x1024xf32>
    %110 = arith.subf %109, %108 : vector<6x1024xf32>
    %111 = arith.mulf %107, %110 : vector<6x1024xf32>
    %112 = arith.mulf %106, %111 : vector<6x1024xf32>
    %cst_26 = arith.constant 2.000000e+00 : f32
    %113 = vector.broadcast %cst_26 : f32 to vector<6x1024xf32>
    %114 = arith.subf %113, %112 : vector<6x1024xf32>
    %115 = arith.mulf %111, %114 : vector<6x1024xf32>
    %116 = arith.mulf %98, %115 : vector<6x1024xf32>
    %117 = tpu.iota {dimensions = array<i32: 1>} : vector<6x128xi32>
    %c6_i32 = arith.constant 6 : i32
    %118 = vector.broadcast %c6_i32 : i32 to vector<6x128xi32>
    %119 = arith.cmpi slt, %117, %118 : vector<6x128xi32>
    %cst_27 = arith.constant 0.000000e+00 : f32
    %120 = vector.broadcast %cst_27 : f32 to vector<1x1xf32>
    %121 = vector.extract_strided_slice %116 {offsets = [0, 0], sizes = [6, 128], strides = [1, 1]} : vector<6x1024xf32> to vector<6x128xf32>
    %cst_28 = arith.constant 0.000000e+00 : f32
    %122 = vector.broadcast %cst_28 : f32 to vector<6x128xf32>
    %123 = arith.select %119, %121, %122 : vector<6x128xi1>, vector<6x128xf32>
    %124 = vector.shape_cast %123 : vector<6x128xf32> to vector<1x6x128xf32>
    %cst_29 = arith.constant dense<0.000000e+00> : vector<1xf32>
    %125 = vector.multi_reduction <add>, %124, %cst_29 [1, 2] : vector<1x6x128xf32> to vector<1xf32>
    %126 = vector.shape_cast %125 : vector<1xf32> to vector<1x1x1xf32>
    %127 = vector.extract %126[0, 0, 0] : f32 from vector<1x1x1xf32>
    %128 = vector.broadcast %127 : f32 to vector<1x1xf32>
    %cst_30 = arith.constant 0.027777778 : f32
    %129 = vector.broadcast %cst_30 : f32 to vector<1x1xf32>
    %130 = arith.mulf %128, %129 : vector<1x1xf32>
    %cst_31 = arith.constant 0.000000e+00 : f32
    %131 = vector.broadcast %cst_31 : f32 to vector<1x1xf32>
    %132 = arith.maximumf %130, %131 : vector<1x1xf32>
    %133 = arith.addf %120, %132 : vector<1x1xf32>
    %134 = vector.extract_strided_slice %116 {offsets = [0, 128], sizes = [6, 128], strides = [1, 1]} : vector<6x1024xf32> to vector<6x128xf32>
    %cst_32 = arith.constant 0.000000e+00 : f32
    %135 = vector.broadcast %cst_32 : f32 to vector<6x128xf32>
    %136 = arith.select %119, %134, %135 : vector<6x128xi1>, vector<6x128xf32>
    %137 = vector.shape_cast %136 : vector<6x128xf32> to vector<1x6x128xf32>
    %cst_33 = arith.constant dense<0.000000e+00> : vector<1xf32>
    %138 = vector.multi_reduction <add>, %137, %cst_33 [1, 2] : vector<1x6x128xf32> to vector<1xf32>
    %139 = vector.shape_cast %138 : vector<1xf32> to vector<1x1x1xf32>
    %140 = vector.extract %139[0, 0, 0] : f32 from vector<1x1x1xf32>
    %141 = vector.broadcast %140 : f32 to vector<1x1xf32>
    %cst_34 = arith.constant 0.027777778 : f32
    %142 = vector.broadcast %cst_34 : f32 to vector<1x1xf32>
    %143 = arith.mulf %141, %142 : vector<1x1xf32>
    %cst_35 = arith.constant 0.000000e+00 : f32
    %144 = vector.broadcast %cst_35 : f32 to vector<1x1xf32>
    %145 = arith.maximumf %143, %144 : vector<1x1xf32>
    %146 = arith.addf %133, %145 : vector<1x1xf32>
    %147 = vector.extract_strided_slice %116 {offsets = [0, 256], sizes = [6, 128], strides = [1, 1]} : vector<6x1024xf32> to vector<6x128xf32>
    %cst_36 = arith.constant 0.000000e+00 : f32
    %148 = vector.broadcast %cst_36 : f32 to vector<6x128xf32>
    %149 = arith.select %119, %147, %148 : vector<6x128xi1>, vector<6x128xf32>
    %150 = vector.shape_cast %149 : vector<6x128xf32> to vector<1x6x128xf32>
    %cst_37 = arith.constant dense<0.000000e+00> : vector<1xf32>
    %151 = vector.multi_reduction <add>, %150, %cst_37 [1, 2] : vector<1x6x128xf32> to vector<1xf32>
    %152 = vector.shape_cast %151 : vector<1xf32> to vector<1x1x1xf32>
    %153 = vector.extract %152[0, 0, 0] : f32 from vector<1x1x1xf32>
    %154 = vector.broadcast %153 : f32 to vector<1x1xf32>
    %cst_38 = arith.constant 0.027777778 : f32
    %155 = vector.broadcast %cst_38 : f32 to vector<1x1xf32>
    %156 = arith.mulf %154, %155 : vector<1x1xf32>
    %cst_39 = arith.constant 0.000000e+00 : f32
    %157 = vector.broadcast %cst_39 : f32 to vector<1x1xf32>
    %158 = arith.maximumf %156, %157 : vector<1x1xf32>
    %159 = arith.addf %146, %158 : vector<1x1xf32>
    %160 = vector.extract_strided_slice %116 {offsets = [0, 384], sizes = [6, 128], strides = [1, 1]} : vector<6x1024xf32> to vector<6x128xf32>
    %cst_40 = arith.constant 0.000000e+00 : f32
    %161 = vector.broadcast %cst_40 : f32 to vector<6x128xf32>
    %162 = arith.select %119, %160, %161 : vector<6x128xi1>, vector<6x128xf32>
    %163 = vector.shape_cast %162 : vector<6x128xf32> to vector<1x6x128xf32>
    %cst_41 = arith.constant dense<0.000000e+00> : vector<1xf32>
    %164 = vector.multi_reduction <add>, %163, %cst_41 [1, 2] : vector<1x6x128xf32> to vector<1xf32>
    %165 = vector.shape_cast %164 : vector<1xf32> to vector<1x1x1xf32>
    %166 = vector.extract %165[0, 0, 0] : f32 from vector<1x1x1xf32>
    %167 = vector.broadcast %166 : f32 to vector<1x1xf32>
    %cst_42 = arith.constant 0.027777778 : f32
    %168 = vector.broadcast %cst_42 : f32 to vector<1x1xf32>
    %169 = arith.mulf %167, %168 : vector<1x1xf32>
    %cst_43 = arith.constant 0.000000e+00 : f32
    %170 = vector.broadcast %cst_43 : f32 to vector<1x1xf32>
    %171 = arith.maximumf %169, %170 : vector<1x1xf32>
    %172 = arith.addf %159, %171 : vector<1x1xf32>
    %173 = vector.extract_strided_slice %116 {offsets = [0, 512], sizes = [6, 128], strides = [1, 1]} : vector<6x1024xf32> to vector<6x128xf32>
    %cst_44 = arith.constant 0.000000e+00 : f32
    %174 = vector.broadcast %cst_44 : f32 to vector<6x128xf32>
    %175 = arith.select %119, %173, %174 : vector<6x128xi1>, vector<6x128xf32>
    %176 = vector.shape_cast %175 : vector<6x128xf32> to vector<1x6x128xf32>
    %cst_45 = arith.constant dense<0.000000e+00> : vector<1xf32>
    %177 = vector.multi_reduction <add>, %176, %cst_45 [1, 2] : vector<1x6x128xf32> to vector<1xf32>
    %178 = vector.shape_cast %177 : vector<1xf32> to vector<1x1x1xf32>
    %179 = vector.extract %178[0, 0, 0] : f32 from vector<1x1x1xf32>
    %180 = vector.broadcast %179 : f32 to vector<1x1xf32>
    %cst_46 = arith.constant 0.027777778 : f32
    %181 = vector.broadcast %cst_46 : f32 to vector<1x1xf32>
    %182 = arith.mulf %180, %181 : vector<1x1xf32>
    %cst_47 = arith.constant 0.000000e+00 : f32
    %183 = vector.broadcast %cst_47 : f32 to vector<1x1xf32>
    %184 = arith.maximumf %182, %183 : vector<1x1xf32>
    %185 = arith.addf %172, %184 : vector<1x1xf32>
    %186 = vector.extract_strided_slice %116 {offsets = [0, 640], sizes = [6, 128], strides = [1, 1]} : vector<6x1024xf32> to vector<6x128xf32>
    %cst_48 = arith.constant 0.000000e+00 : f32
    %187 = vector.broadcast %cst_48 : f32 to vector<6x128xf32>
    %188 = arith.select %119, %186, %187 : vector<6x128xi1>, vector<6x128xf32>
    %189 = vector.shape_cast %188 : vector<6x128xf32> to vector<1x6x128xf32>
    %cst_49 = arith.constant dense<0.000000e+00> : vector<1xf32>
    %190 = vector.multi_reduction <add>, %189, %cst_49 [1, 2] : vector<1x6x128xf32> to vector<1xf32>
    %191 = vector.shape_cast %190 : vector<1xf32> to vector<1x1x1xf32>
    %192 = vector.extract %191[0, 0, 0] : f32 from vector<1x1x1xf32>
    %193 = vector.broadcast %192 : f32 to vector<1x1xf32>
    %cst_50 = arith.constant 0.027777778 : f32
    %194 = vector.broadcast %cst_50 : f32 to vector<1x1xf32>
    %195 = arith.mulf %193, %194 : vector<1x1xf32>
    %cst_51 = arith.constant 0.000000e+00 : f32
    %196 = vector.broadcast %cst_51 : f32 to vector<1x1xf32>
    %197 = arith.maximumf %195, %196 : vector<1x1xf32>
    %198 = arith.addf %185, %197 : vector<1x1xf32>
    %199 = vector.extract_strided_slice %116 {offsets = [0, 768], sizes = [6, 128], strides = [1, 1]} : vector<6x1024xf32> to vector<6x128xf32>
    %cst_52 = arith.constant 0.000000e+00 : f32
    %200 = vector.broadcast %cst_52 : f32 to vector<6x128xf32>
    %201 = arith.select %119, %199, %200 : vector<6x128xi1>, vector<6x128xf32>
    %202 = vector.shape_cast %201 : vector<6x128xf32> to vector<1x6x128xf32>
    %cst_53 = arith.constant dense<0.000000e+00> : vector<1xf32>
    %203 = vector.multi_reduction <add>, %202, %cst_53 [1, 2] : vector<1x6x128xf32> to vector<1xf32>
    %204 = vector.shape_cast %203 : vector<1xf32> to vector<1x1x1xf32>
    %205 = vector.extract %204[0, 0, 0] : f32 from vector<1x1x1xf32>
    %206 = vector.broadcast %205 : f32 to vector<1x1xf32>
    %cst_54 = arith.constant 0.027777778 : f32
    %207 = vector.broadcast %cst_54 : f32 to vector<1x1xf32>
    %208 = arith.mulf %206, %207 : vector<1x1xf32>
    %cst_55 = arith.constant 0.000000e+00 : f32
    %209 = vector.broadcast %cst_55 : f32 to vector<1x1xf32>
    %210 = arith.maximumf %208, %209 : vector<1x1xf32>
    %211 = arith.addf %198, %210 : vector<1x1xf32>
    %212 = vector.extract_strided_slice %116 {offsets = [0, 896], sizes = [6, 128], strides = [1, 1]} : vector<6x1024xf32> to vector<6x128xf32>
    %cst_56 = arith.constant 0.000000e+00 : f32
    %213 = vector.broadcast %cst_56 : f32 to vector<6x128xf32>
    %214 = arith.select %119, %212, %213 : vector<6x128xi1>, vector<6x128xf32>
    %215 = vector.shape_cast %214 : vector<6x128xf32> to vector<1x6x128xf32>
    %cst_57 = arith.constant dense<0.000000e+00> : vector<1xf32>
    %216 = vector.multi_reduction <add>, %215, %cst_57 [1, 2] : vector<1x6x128xf32> to vector<1xf32>
    %217 = vector.shape_cast %216 : vector<1xf32> to vector<1x1x1xf32>
    %218 = vector.extract %217[0, 0, 0] : f32 from vector<1x1x1xf32>
    %219 = vector.broadcast %218 : f32 to vector<1x1xf32>
    %cst_58 = arith.constant 0.027777778 : f32
    %220 = vector.broadcast %cst_58 : f32 to vector<1x1xf32>
    %221 = arith.mulf %219, %220 : vector<1x1xf32>
    %cst_59 = arith.constant 0.000000e+00 : f32
    %222 = vector.broadcast %cst_59 : f32 to vector<1x1xf32>
    %223 = arith.maximumf %221, %222 : vector<1x1xf32>
    %224 = arith.addf %211, %223 : vector<1x1xf32>
    %225 = tpu.iota {dimensions = array<i32: 0>} : vector<8x128xi32>
    %226 = tpu.iota {dimensions = array<i32: 1>} : vector<8x128xi32>
    %c0_i32 = arith.constant 0 : i32
    %227 = vector.broadcast %c0_i32 : i32 to vector<8x128xi32>
    %228 = arith.cmpi eq, %225, %227 : vector<8x128xi32>
    %c0_i32_60 = arith.constant 0 : i32
    %229 = vector.broadcast %c0_i32_60 : i32 to vector<8x128xi32>
    %230 = arith.cmpi eq, %226, %229 : vector<8x128xi32>
    %231 = arith.andi %228, %230 : vector<8x128xi1>
    %cst_61 = arith.constant 0.000000e+00 : f32
    %232 = vector.shape_cast %14 : vector<1x1xf32> to vector<1x1xf32>
    %233 = vector.broadcast %232 : vector<1x1xf32> to vector<8x128xf32>
    %234 = vector.broadcast %cst_61 : f32 to vector<8x128xf32>
    %235 = arith.select %231, %233, %234 : vector<8x128xi1>, vector<8x128xf32>
    %c1_i32 = arith.constant 1 : i32
    %236 = vector.broadcast %c1_i32 : i32 to vector<8x128xi32>
    %237 = arith.cmpi eq, %226, %236 : vector<8x128xi32>
    %238 = arith.andi %228, %237 : vector<8x128xi1>
    %cst_62 = arith.constant 0.000000e+00 : f32
    %239 = vector.shape_cast %20 : vector<1x1xf32> to vector<1x1xf32>
    %240 = vector.broadcast %239 : vector<1x1xf32> to vector<8x128xf32>
    %241 = vector.broadcast %cst_62 : f32 to vector<8x128xf32>
    %242 = arith.select %238, %240, %241 : vector<8x128xi1>, vector<8x128xf32>
    %243 = arith.addf %235, %242 : vector<8x128xf32>
    %c2_i32 = arith.constant 2 : i32
    %244 = vector.broadcast %c2_i32 : i32 to vector<8x128xi32>
    %245 = arith.cmpi eq, %226, %244 : vector<8x128xi32>
    %246 = arith.andi %228, %245 : vector<8x128xi1>
    %cst_63 = arith.constant 0.000000e+00 : f32
    %247 = vector.shape_cast %224 : vector<1x1xf32> to vector<1x1xf32>
    %248 = vector.broadcast %247 : vector<1x1xf32> to vector<8x128xf32>
    %249 = vector.broadcast %cst_63 : f32 to vector<8x128xf32>
    %250 = arith.select %246, %248, %249 : vector<8x128xi1>, vector<8x128xf32>
    %251 = arith.addf %243, %250 : vector<8x128xf32>
    %c0_64 = arith.constant 0 : index
    %c0_65 = arith.constant 0 : index
    %252 = vector.load %arg5[%c0_64, %c0_65] : memref<8x128xf32, #tpu.memory_space<vmem>>, vector<8x128xf32>
    tpu.vector_store %arg5[%c0_64, %c0_65], %251 {strides = array<i32>} : memref<8x128xf32, #tpu.memory_space<vmem>>, vector<8x128xf32>,
    return
  }
  func.func @transform_0(%arg0: i32) -> (i32, i32, i32) {
    %c0_i32 = arith.constant 0 : i32
    %c0_i32_0 = arith.constant 0 : i32
    %c0_i32_1 = arith.constant 0 : i32
    return %arg0, %c0_i32, %c0_i32_0 : i32, i32, i32
  }
  func.func @transform_1(%arg0: i32) -> (i32, i32, i32) {
    %c0_i32 = arith.constant 0 : i32
    %c0_i32_0 = arith.constant 0 : i32
    %c0_i32_1 = arith.constant 0 : i32
    return %arg0, %c0_i32, %c0_i32_0 : i32, i32, i32
  }
  func.func @transform_2(%arg0: i32) -> (i32, i32) {
    %c0_i32 = arith.constant 0 : i32
    %c0_i32_0 = arith.constant 0 : i32
    %c0_i32_1 = arith.constant 0 : i32
    return %c0_i32, %c0_i32_0 : i32, i32
  }
  func.func @transform_3(%arg0: i32) -> (i32, i32) {
    %c0_i32 = arith.constant 0 : i32
    %c0_i32_0 = arith.constant 0 : i32
    %c0_i32_1 = arith.constant 0 : i32
    return %c0_i32, %c0_i32_0 : i32, i32
  }
  func.func @transform_4(%arg0: i32) -> (i32, i32) {
    %c0_i32 = arith.constant 0 : i32
    %c0_i32_0 = arith.constant 0 : i32
    return %arg0, %c0_i32 : i32, i32
  }
}

</mosaic_0001>

<llo_original>
// kernel: tpu_custom_call.1
$region0: #{tpu_custom_call.1}
  #allocation0 [shape = 'u32[]', space=smem, size = 0x4, offset = 0x4, fixed_abs, tag = 'smem constant byte address 0x4 - core index']
  #allocation1 [shape = 'u32[72,128]{1,0:T(1,128)}', space=vmem, size = 0x9000, scoped, tag = 'internal scratch']
  %s0 = inlined_call_operand.hbm [shape: f32[8,16,16], index: 0, kind: input, shape index: {}]
  %s1 = inlined_call_operand.hbm [shape: f32[8,16,16], index: 1, kind: input, shape index: {}]
  %s2 = inlined_call_operand.hbm [shape: f32[16,128], index: 2, kind: input, shape index: {}]
  %s3 = inlined_call_operand.hbm [shape: f32[6,16], index: 3, kind: input, shape index: {}]
  %s4 = inlined_call_operand.hbm [shape: f32[8,128], index: 4, kind: output, shape index: {}]
  %s5 = sld [smem:[#allocation0]]
  $region42: #{tpu_custom_call.1} parent=0
    _
  %s7 = ssub.s32 1, %s5
  %s8 = scalar_select 0, %s7, %s5
  $region1: #{tpu_custom_call.1} parent=0
    #allocation2 [shape = 'u8[65536]{0}', space=vmem, size = 0x10000, scoped, tag = 'input window, operand 0, single buffered']
    #allocation3 [shape = 's32[1]{0}', space=sflag, size = 0x4, scoped, tag = 'scoped memory for tpu_custom_call.1']
    #allocation4 [shape = 's32[1]{0}', space=sflag, size = 0x4, scoped, tag = 'scoped memory for tpu_custom_call.1']
    #allocation5 [shape = 'u8[65536]{0}', space=vmem, size = 0x10000, scoped, tag = 'input window, operand 1, single buffered']
    #allocation6 [shape = 's32[1]{0}', space=sflag, size = 0x4, scoped, tag = 'scoped memory for tpu_custom_call.1']
    #allocation7 [shape = 'u8[8192]{0}', space=vmem, size = 0x2000, scoped, tag = 'input window, operand 2, single buffered']
    #allocation8 [shape = 'u8[4096]{0}', space=vmem, size = 0x1000, scoped, tag = 'input window, operand 3, single buffered']
    #allocation9 [shape = 's32[1]{0}', space=sflag, size = 0x4, scoped, tag = 'scoped memory for tpu_custom_call.1']
    #allocation10 [shape = 'u8[4096]{0}', space=vmem, size = 0x1000, scoped, tag = 'output window, operand 0, single buffered']
    %9 = vsyncpa [#allocation3], 0
    %10 = vsyncpa [#allocation6], 0
    %11 = vsyncpa [#allocation9], 0
    %12 = vsyncpa [#allocation4], 0
    // Predicated region
    $region2: #{tpu_custom_call.1} parent=1 // pred_check
      _
    $region3: #{tpu_custom_call.1} parent=1 // pred_check_branch
      %14 = sbr.rel (0) target = $region5
    $region4: #{tpu_custom_call.1} parent=1 // pred_region
      %16 = vsyncadd [#allocation3], 0
      %s17 = sshll.u32 %s0, 4
      %s18 = int_to_ptr.hbm [resolvable:$true] %s17
      %s19 = sshll.u32 [#allocation2], 4
      %s20 = int_to_ptr.vmem [resolvable:$true] %s19
      %25 = dma.hbm_to_vmem [thread:$0]  %s18, 2048, %s20, [#allocation3], 128, 128, 8
    $region5: #{tpu_custom_call.1} parent=1 // pred_fallthru
      _
    // Predicated region
    $region6: #{tpu_custom_call.1} parent=1 // pred_check
      _
    $region7: #{tpu_custom_call.1} parent=1 // pred_check_branch
      %27 = sbr.rel (0) target = $region9
    $region8: #{tpu_custom_call.1} parent=1 // pred_region
      %29 = vsyncadd [#allocation6], 0
      %s30 = sshll.u32 %s1, 4
      %s31 = int_to_ptr.hbm [resolvable:$true] %s30
      %s32 = sshll.u32 [#allocation5], 4
      %s33 = int_to_ptr.vmem [resolvable:$true] %s32
      %38 = dma.hbm_to_vmem [thread:$0]  %s31, 2048, %s33, [#allocation6], 128, 128, 8
    $region9: #{tpu_custom_call.1} parent=1 // pred_fallthru
      _
    // Predicated region
    $region10: #{tpu_custom_call.1} parent=1 // pred_check
      _
    $region11: #{tpu_custom_call.1} parent=1 // pred_check_branch
      %40 = sbr.rel (0) target = $region13
    $region12: #{tpu_custom_call.1} parent=1 // pred_region
      %42 = vsyncadd [#allocation6], 0
      %s43 = sshll.u32 %s2, 4
      %s44 = int_to_ptr.hbm [resolvable:$true] %s43
      %s45 = sshll.u32 [#allocation7], 4
      %s46 = int_to_ptr.vmem [resolvable:$true] %s45
      %51 = dma.hbm_to_vmem [thread:$0]  %s44, 256, %s46, [#allocation6], 128, 128, 8
    $region13: #{tpu_custom_call.1} parent=1 // pred_fallthru
      _
    // Predicated region
    $region14: #{tpu_custom_call.1} parent=1 // pred_check
      _
    $region15: #{tpu_custom_call.1} parent=1 // pred_check_branch
      %53 = sbr.rel (0) target = $region17
    $region16: #{tpu_custom_call.1} parent=1 // pred_region
      %55 = vsyncadd [#allocation9], 0
      %s57 = sshll.u32 %s3, 4
      %s58 = int_to_ptr.hbm [resolvable:$true] %s57
      %s59 = sshll.u32 [#allocation8], 4
      %s60 = int_to_ptr.vmem [resolvable:$true] %s59
      %62 = dma.hbm_to_vmem [thread:$0]  %s58, 128, %s60, [#allocation9]
    $region17: #{tpu_custom_call.1} parent=1 // pred_fallthru
      _
    // Predicated region
    $region18: #{tpu_custom_call.1} parent=1 // pred_check
      _
    $region19: #{tpu_custom_call.1} parent=1 // pred_check_branch
      %64 = sbr.rel (0) target = $region21
    $region20: #{tpu_custom_call.1} parent=1 // pred_region
      %66 = dma.done [#allocation3], 2048
    $region21: #{tpu_custom_call.1} parent=1 // pred_fallthru
      _
    // Predicated region
    $region22: #{tpu_custom_call.1} parent=1 // pred_check
      _
    $region23: #{tpu_custom_call.1} parent=1 // pred_check_branch
      %68 = sbr.rel (0) target = $region25
    $region24: #{tpu_custom_call.1} parent=1 // pred_region
      %70 = dma.done [#allocation6], 2048
    $region25: #{tpu_custom_call.1} parent=1 // pred_fallthru
      _
    // Predicated region
    $region26: #{tpu_custom_call.1} parent=1 // pred_check
      _
    $region27: #{tpu_custom_call.1} parent=1 // pred_check_branch
      %72 = sbr.rel (0) target = $region29
    $region28: #{tpu_custom_call.1} parent=1 // pred_region
      %74 = dma.done [#allocation6], 256
    $region29: #{tpu_custom_call.1} parent=1 // pred_fallthru
      _
    // Predicated region
    $region30: #{tpu_custom_call.1} parent=1 // pred_check
      _
    $region31: #{tpu_custom_call.1} parent=1 // pred_check_branch
      %76 = sbr.rel (0) target = $region33
    $region32: #{tpu_custom_call.1} parent=1 // pred_region
      %78 = dma.done [#allocation9], 128
    $region33: #{tpu_custom_call.1} parent=1 // pred_fallthru
      _
    %v79 = vld [vmem:[#allocation2] sm:$0xff]
    %v80 = vld [vmem:[#allocation2 + $0x8] sm:$0xff]
    %v81 = vld [vmem:[#allocation2 + $0x10] sm:$0xff]
    %v82 = vld [vmem:[#allocation2 + $0x18] sm:$0xff]
    %v83 = vld [vmem:[#allocation2 + $0x20] sm:$0xff]
    %v84 = vld [vmem:[#allocation2 + $0x28] sm:$0xff]
    %v85 = vld [vmem:[#allocation2 + $0x30] sm:$0xff]
    %v86 = vld [vmem:[#allocation2 + $0x38] sm:$0xff]
    %v87 = vld [vmem:[#allocation2 + $0x40] sm:$0xff]
    %v88 = vld [vmem:[#allocation2 + $0x48] sm:$0xff]
    %v89 = vld [vmem:[#allocation2 + $0x50] sm:$0xff]
    %v90 = vld [vmem:[#allocation2 + $0x58] sm:$0xff]
    %v91 = vld [vmem:[#allocation2 + $0x60] sm:$0xff]
    %v92 = vld [vmem:[#allocation2 + $0x68] sm:$0xff]
    %v93 = vld [vmem:[#allocation2 + $0x70] sm:$0xff]
    %v94 = vld [vmem:[#allocation2 + $0x78] sm:$0xff]
    %v95 = vxor.u32 %v79, 2147483648
    %v96 = vxor.u32 %v80, 2147483648
    %v97 = vxor.u32 %v81, 2147483648
    %v98 = vxor.u32 %v82, 2147483648
    %v99 = vxor.u32 %v83, 2147483648
    %v100 = vxor.u32 %v84, 2147483648
    %v101 = vxor.u32 %v85, 2147483648
    %v102 = vxor.u32 %v86, 2147483648
    %v103 = vxor.u32 %v87, 2147483648
    %v104 = vxor.u32 %v88, 2147483648
    %v105 = vxor.u32 %v89, 2147483648
    %v106 = vxor.u32 %v90, 2147483648
    %v107 = vxor.u32 %v91, 2147483648
    %v108 = vxor.u32 %v92, 2147483648
    %v109 = vxor.u32 %v93, 2147483648
    %v110 = vxor.u32 %v94, 2147483648
    %v111 = vmul.f32 %v95, 1.442695
    %v112 = vpow.pop %v111
    %v113 = vmul.f32 %v96, 1.442695
    %v114 = vpow.pop %v113
    %v115 = vmul.f32 %v97, 1.442695
    %v116 = vpow.pop %v115
    %v117 = vmul.f32 %v98, 1.442695
    %v118 = vpow.pop %v117
    %v119 = vmul.f32 %v99, 1.442695
    %v120 = vpow.pop %v119
    %v121 = vmul.f32 %v100, 1.442695
    %v122 = vpow.pop %v121
    %v123 = vmul.f32 %v101, 1.442695
    %v124 = vpow.pop %v123
    %v125 = vmul.f32 %v102, 1.442695
    %v126 = vpow.pop %v125
    %v127 = vmul.f32 %v103, 1.442695
    %v128 = vpow.pop %v127
    %v129 = vmul.f32 %v104, 1.442695
    %v130 = vpow.pop %v129
    %v131 = vmul.f32 %v105, 1.442695
    %v132 = vpow.pop %v131
    %v133 = vmul.f32 %v106, 1.442695
    %v134 = vpow.pop %v133
    %v135 = vmul.f32 %v107, 1.442695
    %v136 = vpow.pop %v135
    %v137 = vmul.f32 %v108, 1.442695
    %v138 = vpow.pop %v137
    %v139 = vmul.f32 %v109, 1.442695
    %v140 = vpow.pop %v139
    %v141 = vmul.f32 %v110, 1.442695
    %v142 = vpow.pop %v141
    %v143 = vadd.f32 %v112, 1.0
    %v144 = vadd.f32 %v114, 1.0
    %v145 = vadd.f32 %v116, 1.0
    %v146 = vadd.f32 %v118, 1.0
    %v147 = vadd.f32 %v120, 1.0
    %v148 = vadd.f32 %v122, 1.0
    %v149 = vadd.f32 %v124, 1.0
    %v150 = vadd.f32 %v126, 1.0
    %v151 = vadd.f32 %v128, 1.0
    %v152 = vadd.f32 %v130, 1.0
    %v153 = vadd.f32 %v132, 1.0
    %v154 = vadd.f32 %v134, 1.0
    %v155 = vadd.f32 %v136, 1.0
    %v156 = vadd.f32 %v138, 1.0
    %v157 = vadd.f32 %v140, 1.0
    %v158 = vadd.f32 %v142, 1.0
    %v159 = vrcp.pop %v143
    %v160 = vmul.f32 %v143, %v159
    %v161 = vsub.f32 1.0, %v160
    %v162 = vmul.f32 %v159, %v161
    %v163 = vadd.f32 %v159, %v162
    %vm164 = vweird.f32 %v143
    %vm165 = vweird.f32 %v159
    %vm166 = vmor %vm164, %vm165
    %v167 = vsel %vm166, %v159, %v163
    %v168 = vand.u32 2147483647, %v143
    %vm169 = vcmp.eq.f32.partialorder %v168, 8.507059e+37
    %v170 = vand.u32 %v143, 2147483648
    %v171 = vor.u32 1.1754944e-38, %v170
    %v172 = vsel %vm169, %v171, %v167
    %v173 = vmul.f32 1.0, %v172
    %v174 = vrcp.pop %v144
    %v175 = vmul.f32 %v144, %v174
    %v176 = vsub.f32 1.0, %v175
    %v177 = vmul.f32 %v174, %v176
    %v178 = vadd.f32 %v174, %v177
    %vm179 = vweird.f32 %v144
    %vm180 = vweird.f32 %v174
    %vm181 = vmor %vm179, %vm180
    %v182 = vsel %vm181, %v174, %v178
    %v183 = vand.u32 2147483647, %v144
    %vm184 = vcmp.eq.f32.partialorder %v183, 8.507059e+37
    %v185 = vand.u32 %v144, 2147483648
    %v186 = vor.u32 1.1754944e-38, %v185
    %v187 = vsel %vm184, %v186, %v182
    %v188 = vmul.f32 1.0, %v187
    %v189 = vrcp.pop %v145
    %v190 = vmul.f32 %v145, %v189
    %v191 = vsub.f32 1.0, %v190
    %v192 = vmul.f32 %v189, %v191
    %v193 = vadd.f32 %v189, %v192
    %vm194 = vweird.f32 %v145
    %vm195 = vweird.f32 %v189
    %vm196 = vmor %vm194, %vm195
    %v197 = vsel %vm196, %v189, %v193
    %v198 = vand.u32 2147483647, %v145
    %vm199 = vcmp.eq.f32.partialorder %v198, 8.507059e+37
    %v200 = vand.u32 %v145, 2147483648
    %v201 = vor.u32 1.1754944e-38, %v200
    %v202 = vsel %vm199, %v201, %v197
    %v203 = vmul.f32 1.0, %v202
    %v204 = vrcp.pop %v146
    %v205 = vmul.f32 %v146, %v204
    %v206 = vsub.f32 1.0, %v205
    %v207 = vmul.f32 %v204, %v206
    %v208 = vadd.f32 %v204, %v207
    %vm209 = vweird.f32 %v146
    %vm210 = vweird.f32 %v204
    %vm211 = vmor %vm209, %vm210
    %v212 = vsel %vm211, %v204, %v208
    %v213 = vand.u32 2147483647, %v146
    %vm214 = vcmp.eq.f32.partialorder %v213, 8.507059e+37
    %v215 = vand.u32 %v146, 2147483648
    %v216 = vor.u32 1.1754944e-38, %v215
    %v217 = vsel %vm214, %v216, %v212
    %v218 = vmul.f32 1.0, %v217
    %v219 = vrcp.pop %v147
    %v220 = vmul.f32 %v147, %v219
    %v221 = vsub.f32 1.0, %v220
    %v222 = vmul.f32 %v219, %v221
    %v223 = vadd.f32 %v219, %v222
    %vm224 = vweird.f32 %v147
    %vm225 = vweird.f32 %v219
    %vm226 = vmor %vm224, %vm225
    %v227 = vsel %vm226, %v219, %v223
    %v228 = vand.u32 2147483647, %v147
    %vm229 = vcmp.eq.f32.partialorder %v228, 8.507059e+37
    %v230 = vand.u32 %v147, 2147483648
    %v231 = vor.u32 1.1754944e-38, %v230
    %v232 = vsel %vm229, %v231, %v227
    %v233 = vmul.f32 1.0, %v232
    %v234 = vrcp.pop %v148
    %v235 = vmul.f32 %v148, %v234
    %v236 = vsub.f32 1.0, %v235
    %v237 = vmul.f32 %v234, %v236
    %v238 = vadd.f32 %v234, %v237
    %vm239 = vweird.f32 %v148
    %vm240 = vweird.f32 %v234
    %vm241 = vmor %vm239, %vm240
    %v242 = vsel %vm241, %v234, %v238
    %v243 = vand.u32 2147483647, %v148
    %vm244 = vcmp.eq.f32.partialorder %v243, 8.507059e+37
    %v245 = vand.u32 %v148, 2147483648
    %v246 = vor.u32 1.1754944e-38, %v245
    %v247 = vsel %vm244, %v246, %v242
    %v248 = vmul.f32 1.0, %v247
    %v249 = vrcp.pop %v149
    %v250 = vmul.f32 %v149, %v249
    %v251 = vsub.f32 1.0, %v250
    %v252 = vmul.f32 %v249, %v251
    %v253 = vadd.f32 %v249, %v252
    %vm254 = vweird.f32 %v149
    %vm255 = vweird.f32 %v249
    %vm256 = vmor %vm254, %vm255
    %v257 = vsel %vm256, %v249, %v253
    %v258 = vand.u32 2147483647, %v149
    %vm259 = vcmp.eq.f32.partialorder %v258, 8.507059e+37
    %v260 = vand.u32 %v149, 2147483648
    %v261 = vor.u32 1.1754944e-38, %v260
    %v262 = vsel %vm259, %v261, %v257
    %v263 = vmul.f32 1.0, %v262
    %v264 = vrcp.pop %v150
    %v265 = vmul.f32 %v150, %v264
    %v266 = vsub.f32 1.0, %v265
    %v267 = vmul.f32 %v264, %v266
    %v268 = vadd.f32 %v264, %v267
    %vm269 = vweird.f32 %v150
    %vm270 = vweird.f32 %v264
    %vm271 = vmor %vm269, %vm270
    %v272 = vsel %vm271, %v264, %v268
    %v273 = vand.u32 2147483647, %v150
    %vm274 = vcmp.eq.f32.partialorder %v273, 8.507059e+37
    %v275 = vand.u32 %v150, 2147483648
    %v276 = vor.u32 1.1754944e-38, %v275
    %v277 = vsel %vm274, %v276, %v272
    %v278 = vmul.f32 1.0, %v277
    %v279 = vrcp.pop %v151
    %v280 = vmul.f32 %v151, %v279
    %v281 = vsub.f32 1.0, %v280
    %v282 = vmul.f32 %v279, %v281
    %v283 = vadd.f32 %v279, %v282
    %vm284 = vweird.f32 %v151
    %vm285 = vweird.f32 %v279
    %vm286 = vmor %vm284, %vm285
    %v287 = vsel %vm286, %v279, %v283
    %v288 = vand.u32 2147483647, %v151
    %vm289 = vcmp.eq.f32.partialorder %v288, 8.507059e+37
    %v290 = vand.u32 %v151, 2147483648
    %v291 = vor.u32 1.1754944e-38, %v290
    %v292 = vsel %vm289, %v291, %v287
    %v293 = vmul.f32 1.0, %v292
    %v294 = vrcp.pop %v152
    %v295 = vmul.f32 %v152, %v294
    %v296 = vsub.f32 1.0, %v295
    %v297 = vmul.f32 %v294, %v296
    %v298 = vadd.f32 %v294, %v297
    %vm299 = vweird.f32 %v152
    %vm300 = vweird.f32 %v294
    %vm301 = vmor %vm299, %vm300
    %v302 = vsel %vm301, %v294, %v298
    %v303 = vand.u32 2147483647, %v152
    %vm304 = vcmp.eq.f32.partialorder %v303, 8.507059e+37
    %v305 = vand.u32 %v152, 2147483648
    %v306 = vor.u32 1.1754944e-38, %v305
    %v307 = vsel %vm304, %v306, %v302
    %v308 = vmul.f32 1.0, %v307
    %v309 = vrcp.pop %v153
    %v310 = vmul.f32 %v153, %v309
    %v311 = vsub.f32 1.0, %v310
    %v312 = vmul.f32 %v309, %v311
    %v313 = vadd.f32 %v309, %v312
    %vm314 = vweird.f32 %v153
    %vm315 = vweird.f32 %v309
    %vm316 = vmor %vm314, %vm315
    %v317 = vsel %vm316, %v309, %v313
    %v318 = vand.u32 2147483647, %v153
    %vm319 = vcmp.eq.f32.partialorder %v318, 8.507059e+37
    %v320 = vand.u32 %v153, 2147483648
    %v321 = vor.u32 1.1754944e-38, %v320
    %v322 = vsel %vm319, %v321, %v317
    %v323 = vmul.f32 1.0, %v322
    %v324 = vrcp.pop %v154
    %v325 = vmul.f32 %v154, %v324
    %v326 = vsub.f32 1.0, %v325
    %v327 = vmul.f32 %v324, %v326
    %v328 = vadd.f32 %v324, %v327
    %vm329 = vweird.f32 %v154
    %vm330 = vweird.f32 %v324
    %vm331 = vmor %vm329, %vm330
    %v332 = vsel %vm331, %v324, %v328
    %v333 = vand.u32 2147483647, %v154
    %vm334 = vcmp.eq.f32.partialorder %v333, 8.507059e+37
    %v335 = vand.u32 %v154, 2147483648
    %v336 = vor.u32 1.1754944e-38, %v335
    %v337 = vsel %vm334, %v336, %v332
    %v338 = vmul.f32 1.0, %v337
    %v339 = vrcp.pop %v155
    %v340 = vmul.f32 %v155, %v339
    %v341 = vsub.f32 1.0, %v340
    %v342 = vmul.f32 %v339, %v341
    %v343 = vadd.f32 %v339, %v342
    %vm344 = vweird.f32 %v155
    %vm345 = vweird.f32 %v339
    %vm346 = vmor %vm344, %vm345
    %v347 = vsel %vm346, %v339, %v343
    %v348 = vand.u32 2147483647, %v155
    %vm349 = vcmp.eq.f32.partialorder %v348, 8.507059e+37
    %v350 = vand.u32 %v155, 2147483648
    %v351 = vor.u32 1.1754944e-38, %v350
    %v352 = vsel %vm349, %v351, %v347
    %v353 = vmul.f32 1.0, %v352
    %v354 = vrcp.pop %v156
    %v355 = vmul.f32 %v156, %v354
    %v356 = vsub.f32 1.0, %v355
    %v357 = vmul.f32 %v354, %v356
    %v358 = vadd.f32 %v354, %v357
    %vm359 = vweird.f32 %v156
    %vm360 = vweird.f32 %v354
    %vm361 = vmor %vm359, %vm360
    %v362 = vsel %vm361, %v354, %v358
    %v363 = vand.u32 2147483647, %v156
    %vm364 = vcmp.eq.f32.partialorder %v363, 8.507059e+37
    %v365 = vand.u32 %v156, 2147483648
    %v366 = vor.u32 1.1754944e-38, %v365
    %v367 = vsel %vm364, %v366, %v362
    %v368 = vmul.f32 1.0, %v367
    %v369 = vrcp.pop %v157
    %v370 = vmul.f32 %v157, %v369
    %v371 = vsub.f32 1.0, %v370
    %v372 = vmul.f32 %v369, %v371
    %v373 = vadd.f32 %v369, %v372
    %vm374 = vweird.f32 %v157
    %vm375 = vweird.f32 %v369
    %vm376 = vmor %vm374, %vm375
    %v377 = vsel %vm376, %v369, %v373
    %v378 = vand.u32 2147483647, %v157
    %vm379 = vcmp.eq.f32.partialorder %v378, 8.507059e+37
    %v380 = vand.u32 %v157, 2147483648
    %v381 = vor.u32 1.1754944e-38, %v380
    %v382 = vsel %vm379, %v381, %v377
    %v383 = vmul.f32 1.0, %v382
    %v384 = vrcp.pop %v158
    %v385 = vmul.f32 %v158, %v384
    %v386 = vsub.f32 1.0, %v385
    %v387 = vmul.f32 %v384, %v386
    %v388 = vadd.f32 %v384, %v387
    %vm389 = vweird.f32 %v158
    %vm390 = vweird.f32 %v384
    %vm391 = vmor %vm389, %vm390
    %v392 = vsel %vm391, %v384, %v388
    %v393 = vand.u32 2147483647, %v158
    %vm394 = vcmp.eq.f32.partialorder %v393, 8.507059e+37
    %v395 = vand.u32 %v158, 2147483648
    %v396 = vor.u32 1.1754944e-38, %v395
    %v397 = vsel %vm394, %v396, %v392
    %v398 = vmul.f32 1.0, %v397
    %v399 = vld [vmem:[#allocation5] sm:$0xff]
    %v400 = vld [vmem:[#allocation5 + $0x8] sm:$0xff]
    %v401 = vld [vmem:[#allocation5 + $0x10] sm:$0xff]
    %v402 = vld [vmem:[#allocation5 + $0x18] sm:$0xff]
    %v403 = vld [vmem:[#allocation5 + $0x20] sm:$0xff]
    %v404 = vld [vmem:[#allocation5 + $0x28] sm:$0xff]
    %v405 = vld [vmem:[#allocation5 + $0x30] sm:$0xff]
    %v406 = vld [vmem:[#allocation5 + $0x38] sm:$0xff]
    %v407 = vld [vmem:[#allocation5 + $0x40] sm:$0xff]
    %v408 = vld [vmem:[#allocation5 + $0x48] sm:$0xff]
    %v409 = vld [vmem:[#allocation5 + $0x50] sm:$0xff]
    %v410 = vld [vmem:[#allocation5 + $0x58] sm:$0xff]
    %v411 = vld [vmem:[#allocation5 + $0x60] sm:$0xff]
    %v412 = vld [vmem:[#allocation5 + $0x68] sm:$0xff]
    %v413 = vld [vmem:[#allocation5 + $0x70] sm:$0xff]
    %v414 = vld [vmem:[#allocation5 + $0x78] sm:$0xff]
    %v415 = vmul.f32 %v173, %v399
    %v416 = vmul.f32 %v188, %v400
    %v417 = vmul.f32 %v203, %v401
    %v418 = vmul.f32 %v218, %v402
    %v419 = vmul.f32 %v233, %v403
    %v420 = vmul.f32 %v248, %v404
    %v421 = vmul.f32 %v263, %v405
    %v422 = vmul.f32 %v278, %v406
    %v423 = vmul.f32 %v293, %v407
    %v424 = vmul.f32 %v308, %v408
    %v425 = vmul.f32 %v323, %v409
    %v426 = vmul.f32 %v338, %v410
    %v427 = vmul.f32 %v353, %v411
    %v428 = vmul.f32 %v368, %v412
    %v429 = vmul.f32 %v383, %v413
    %v430 = vmul.f32 %v398, %v414
    %vm431 = vcmask 130048
    %v432 = vsel %vm431, %v415, 0.0
    %v433 = vsel %vm431, %v416, 0.0
    %v434 = vadd.f32 %v432, %v433
    %v435 = vsel %vm431, %v417, 0.0
    %v436 = vadd.f32 %v434, %v435
    %v437 = vsel %vm431, %v418, 0.0
    %v438 = vadd.f32 %v436, %v437
    %v439 = vsel %vm431, %v419, 0.0
    %v440 = vadd.f32 %v438, %v439
    %v441 = vsel %vm431, %v420, 0.0
    %v442 = vadd.f32 %v440, %v441
    %v443 = vsel %vm431, %v421, 0.0
    %v444 = vadd.f32 %v442, %v443
    %v445 = vsel %vm431, %v422, 0.0
    %v446 = vadd.f32 %v444, %v445
    %v447 = vsel %vm431, %v423, 0.0
    %v448 = vadd.f32 %v446, %v447
    %v449 = vsel %vm431, %v424, 0.0
    %v450 = vadd.f32 %v448, %v449
    %v451 = vsel %vm431, %v425, 0.0
    %v452 = vadd.f32 %v450, %v451
    %v453 = vsel %vm431, %v426, 0.0
    %v454 = vadd.f32 %v452, %v453
    %v455 = vsel %vm431, %v427, 0.0
    %v456 = vadd.f32 %v454, %v455
    %v457 = vsel %vm431, %v428, 0.0
    %v458 = vadd.f32 %v456, %v457
    %v459 = vsel %vm431, %v429, 0.0
    %v460 = vadd.f32 %v458, %v459
    %v461 = vsel %vm431, %v430, 0.0
    %v462 = vadd.f32 %v460, %v461
    %463 = vadd.xlane.f32.xlu0 %v462
    %v464 = vpop.xlane.xlu0 %463
    %v465 = vrot.slane %v464, 4
    %v466 = vadd.f32 %v464, %v465
    %v467 = vrot.slane %v466, 2
    %v468 = vadd.f32 %v466, %v467
    %v469 = vrot.slane %v468, 1
    %v470 = vadd.f32 %v468, %v469
    %s471 = vtos %v470
    %v472 = vadd.f32 %v173, %v399
    %v473 = vadd.f32 %v188, %v400
    %v474 = vadd.f32 %v203, %v401
    %v475 = vadd.f32 %v218, %v402
    %v476 = vadd.f32 %v233, %v403
    %v477 = vadd.f32 %v248, %v404
    %v478 = vadd.f32 %v263, %v405
    %v479 = vadd.f32 %v278, %v406
    %v480 = vadd.f32 %v293, %v407
    %v481 = vadd.f32 %v308, %v408
    %v482 = vadd.f32 %v323, %v409
    %v483 = vadd.f32 %v338, %v410
    %v484 = vadd.f32 %v353, %v411
    %v485 = vadd.f32 %v368, %v412
    %v486 = vadd.f32 %v383, %v413
    %v487 = vadd.f32 %v398, %v414
    %v488 = vsel %vm431, %v472, 0.0
    %v489 = vsel %vm431, %v473, 0.0
    %v490 = vadd.f32 %v488, %v489
    %v491 = vsel %vm431, %v474, 0.0
    %v492 = vadd.f32 %v490, %v491
    %v493 = vsel %vm431, %v475, 0.0
    %v494 = vadd.f32 %v492, %v493
    %v495 = vsel %vm431, %v476, 0.0
    %v496 = vadd.f32 %v494, %v495
    %v497 = vsel %vm431, %v477, 0.0
    %v498 = vadd.f32 %v496, %v497
    %v499 = vsel %vm431, %v478, 0.0
    %v500 = vadd.f32 %v498, %v499
    %v501 = vsel %vm431, %v479, 0.0
    %v502 = vadd.f32 %v500, %v501
    %v503 = vsel %vm431, %v480, 0.0
    %v504 = vadd.f32 %v502, %v503
    %v505 = vsel %vm431, %v481, 0.0
    %v506 = vadd.f32 %v504, %v505
    %v507 = vsel %vm431, %v482, 0.0
    %v508 = vadd.f32 %v506, %v507
    %v509 = vsel %vm431, %v483, 0.0
    %v510 = vadd.f32 %v508, %v509
    %v511 = vsel %vm431, %v484, 0.0
    %v512 = vadd.f32 %v510, %v511
    %v513 = vsel %vm431, %v485, 0.0
    %v514 = vadd.f32 %v512, %v513
    %v515 = vsel %vm431, %v486, 0.0
    %v516 = vadd.f32 %v514, %v515
    %v517 = vsel %vm431, %v487, 0.0
    %v518 = vadd.f32 %v516, %v517
    %519 = vadd.xlane.f32.xlu0 %v518
    %v520 = vpop.xlane.xlu0 %519
    %v521 = vrot.slane %v520, 4
    %v522 = vadd.f32 %v520, %v521
    %v523 = vrot.slane %v522, 2
    %v524 = vadd.f32 %v522, %v523
    %v525 = vrot.slane %v524, 1
    %v526 = vadd.f32 %v524, %v525
    %s527 = vtos %v526
    %v528 = vsub.f32 %v173, 0.5
    %v529 = vsub.f32 %v188, 0.5
    %v530 = vsub.f32 %v203, 0.5
    %v531 = vsub.f32 %v218, 0.5
    %v532 = vsub.f32 %v233, 0.5
    %v533 = vsub.f32 %v248, 0.5
    %v534 = vsub.f32 %v263, 0.5
    %v535 = vsub.f32 %v278, 0.5
    %v536 = vsub.f32 %v293, 0.5
    %v537 = vsub.f32 %v308, 0.5
    %v538 = vsub.f32 %v323, 0.5
    %v539 = vsub.f32 %v338, 0.5
    %v540 = vsub.f32 %v353, 0.5
    %v541 = vsub.f32 %v368, 0.5
    %v542 = vsub.f32 %v383, 0.5
    %v543 = vsub.f32 %v398, 0.5
    %v544 = vsub.f32 %v399, 0.5
    %v545 = vsub.f32 %v400, 0.5
    %v546 = vsub.f32 %v401, 0.5
    %v547 = vsub.f32 %v402, 0.5
    %v548 = vsub.f32 %v403, 0.5
    %v549 = vsub.f32 %v404, 0.5
    %v550 = vsub.f32 %v405, 0.5
    %v551 = vsub.f32 %v406, 0.5
    %v552 = vsub.f32 %v407, 0.5
    %v553 = vsub.f32 %v408, 0.5
    %v554 = vsub.f32 %v409, 0.5
    %v555 = vsub.f32 %v410, 0.5
    %v556 = vsub.f32 %v411, 0.5
    %v557 = vsub.f32 %v412, 0.5
    %v558 = vsub.f32 %v413, 0.5
    %v559 = vsub.f32 %v414, 0.5
    %v560 = vadd.f32 %v528, %v544
    %v561 = vadd.f32 %v529, %v545
    %v562 = vadd.f32 %v530, %v546
    %v563 = vadd.f32 %v531, %v547
    %v564 = vadd.f32 %v532, %v548
    %v565 = vadd.f32 %v533, %v549
    %v566 = vadd.f32 %v534, %v550
    %v567 = vadd.f32 %v535, %v551
    %v568 = vadd.f32 %v536, %v552
    %v569 = vadd.f32 %v537, %v553
    %v570 = vadd.f32 %v538, %v554
    %v571 = vadd.f32 %v539, %v555
    %v572 = vadd.f32 %v540, %v556
    %v573 = vadd.f32 %v541, %v557
    %v574 = vadd.f32 %v542, %v558
    %v575 = vadd.f32 %v543, %v559
    %v576 = vsub.f32 %v528, %v544
    %v577 = vsub.f32 %v529, %v545
    %v578 = vsub.f32 %v530, %v546
    %v579 = vsub.f32 %v531, %v547
    %v580 = vsub.f32 %v532, %v548
    %v581 = vsub.f32 %v533, %v549
    %v582 = vsub.f32 %v534, %v550
    %v583 = vsub.f32 %v535, %v551
    %v584 = vsub.f32 %v536, %v552
    %v585 = vsub.f32 %v537, %v553
    %v586 = vsub.f32 %v538, %v554
    %v587 = vsub.f32 %v539, %v555
    %v588 = vsub.f32 %v540, %v556
    %v589 = vsub.f32 %v541, %v557
    %v590 = vsub.f32 %v542, %v558
    %v591 = vsub.f32 %v543, %v559
    %v592 = vmul.f32 %v560, %v560
    %v593 = vmul.f32 %v561, %v561
    %v594 = vmul.f32 %v562, %v562
    %v595 = vmul.f32 %v563, %v563
    %v596 = vmul.f32 %v564, %v564
    %v597 = vmul.f32 %v565, %v565
    %v598 = vmul.f32 %v566, %v566
    %v599 = vmul.f32 %v567, %v567
    %v600 = vmul.f32 %v568, %v568
    %v601 = vmul.f32 %v569, %v569
    %v602 = vmul.f32 %v570, %v570
    %v603 = vmul.f32 %v571, %v571
    %v604 = vmul.f32 %v572, %v572
    %v605 = vmul.f32 %v573, %v573
    %v606 = vmul.f32 %v574, %v574
    %v607 = vmul.f32 %v575, %v575
    %v608 = vmul.f32 %v576, %v576
    %v609 = vmul.f32 %v577, %v577
    %v610 = vmul.f32 %v578, %v578
    %v611 = vmul.f32 %v579, %v579
    %v612 = vmul.f32 %v580, %v580
    %v613 = vmul.f32 %v581, %v581
    %v614 = vmul.f32 %v582, %v582
    %v615 = vmul.f32 %v583, %v583
    %v616 = vmul.f32 %v584, %v584
    %v617 = vmul.f32 %v585, %v585
    %v618 = vmul.f32 %v586, %v586
    %v619 = vmul.f32 %v587, %v587
    %v620 = vmul.f32 %v588, %v588
    %v621 = vmul.f32 %v589, %v589
    %v622 = vmul.f32 %v590, %v590
    %v623 = vmul.f32 %v591, %v591
    %v624 = vld [vmem:[#allocation7] sm:$0xff]
    %v625 = vld [vmem:[#allocation7 + $0x8] sm:$0xff]
    %v627 = vsel %vm431, %v528, 0
    %v630 = vsel %vm431, %v529, 0
    %v633 = vsel %vm431, %v530, 0
    %v636 = vsel %vm431, %v531, 0
    %v639 = vsel %vm431, %v532, 0
    %v642 = vsel %vm431, %v533, 0
    %v645 = vsel %vm431, %v534, 0
    %v648 = vsel %vm431, %v535, 0
    %v651 = vsel %vm431, %v536, 0
    %v654 = vsel %vm431, %v537, 0
    %v657 = vsel %vm431, %v538, 0
    %v660 = vsel %vm431, %v539, 0
    %v663 = vsel %vm431, %v540, 0
    %v666 = vsel %vm431, %v541, 0
    %v669 = vsel %vm431, %v542, 0
    %v672 = vsel %vm431, %v543, 0
    %v675 = vsel %vm431, %v544, 0
    %v678 = vsel %vm431, %v545, 0
    %v681 = vsel %vm431, %v546, 0
    %v684 = vsel %vm431, %v547, 0
    %v687 = vsel %vm431, %v548, 0
    %v690 = vsel %vm431, %v549, 0
    %v693 = vsel %vm431, %v550, 0
    %v696 = vsel %vm431, %v551, 0
    %v699 = vsel %vm431, %v552, 0
    %v702 = vsel %vm431, %v553, 0
    %v705 = vsel %vm431, %v554, 0
    %v708 = vsel %vm431, %v555, 0
    %v711 = vsel %vm431, %v556, 0
    %v714 = vsel %vm431, %v557, 0
    %v717 = vsel %vm431, %v558, 0
    %v720 = vsel %vm431, %v559, 0
    %v723 = vsel %vm431, %v592, 0
    %v726 = vsel %vm431, %v593, 0
    %v729 = vsel %vm431, %v594, 0
    %v732 = vsel %vm431, %v595, 0
    %v735 = vsel %vm431, %v596, 0
    %v738 = vsel %vm431, %v597, 0
    %v741 = vsel %vm431, %v598, 0
    %v744 = vsel %vm431, %v599, 0
    %v747 = vsel %vm431, %v600, 0
    %v750 = vsel %vm431, %v601, 0
    %v753 = vsel %vm431, %v602, 0
    %v756 = vsel %vm431, %v603, 0
    %v759 = vsel %vm431, %v604, 0
    %v762 = vsel %vm431, %v605, 0
    %v765 = vsel %vm431, %v606, 0
    %v768 = vsel %vm431, %v607, 0
    %v771 = vsel %vm431, %v608, 0
    %v774 = vsel %vm431, %v609, 0
    %v777 = vsel %vm431, %v610, 0
    %v780 = vsel %vm431, %v611, 0
    %v783 = vsel %vm431, %v612, 0
    %v786 = vsel %vm431, %v613, 0
    %v789 = vsel %vm431, %v614, 0
    %v792 = vsel %vm431, %v615, 0
    %v795 = vsel %vm431, %v616, 0
    %v798 = vsel %vm431, %v617, 0
    %v801 = vsel %vm431, %v618, 0
    %v804 = vsel %vm431, %v619, 0
    %v807 = vsel %vm431, %v620, 0
    %v810 = vsel %vm431, %v621, 0
    %v813 = vsel %vm431, %v622, 0
    %v816 = vsel %vm431, %v623, 0
    %818 = vmatpush.msra.mxu0 0.0
    %819 = vmatpush.msra.mxu0 0.0
    %820 = vmatpush.msra.mxu0 0.0
    %821 = vmatpush.msra.mxu0 0.0
    %822 = vmatpush.msra.mxu0 0.0
    %823 = vmatpush.msra.mxu0 0.0
    %824 = vmatpush.msra.mxu0 0.0
    %825 = vmatpush.msra.mxu0 0.0
    %826 = vmatpush.msra.mxu0 0.0
    %827 = vmatpush.msra.mxu0 0.0
    %828 = vmatpush.msra.mxu0 0.0
    %829 = vmatpush.msra.mxu0 0.0
    %830 = vmatpush.msra.mxu0 0.0
    %831 = vmatpush.msra.mxu0 0.0
    %832 = vmatpush.msra.mxu0 %v625
    %833 = vmatpush.msra.mxu0 %v624
    %834 = vmatmul.f32.gmra.mxu0 %v627
    %v835 = vpop.f32.mrf.mxu0
    %v836 = vadd.f32 0.0, %v835
    %837 = vmatmul.f32.gmra.mxu0 %v630
    %v838 = vpop.f32.mrf.mxu0
    %v839 = vadd.f32 0.0, %v838
    %840 = vmatmul.f32.gmra.mxu0 %v633
    %v841 = vpop.f32.mrf.mxu0
    %v842 = vadd.f32 0.0, %v841
    %843 = vmatmul.f32.gmra.mxu0 %v636
    %v844 = vpop.f32.mrf.mxu0
    %v845 = vadd.f32 0.0, %v844
    %846 = vmatmul.f32.gmra.mxu0 %v639
    %v847 = vpop.f32.mrf.mxu0
    %v848 = vadd.f32 0.0, %v847
    %849 = vmatmul.f32.gmra.mxu0 %v642
    %v850 = vpop.f32.mrf.mxu0
    %v851 = vadd.f32 0.0, %v850
    %852 = vmatmul.f32.gmra.mxu0 %v645
    %v853 = vpop.f32.mrf.mxu0
    %v854 = vadd.f32 0.0, %v853
    %855 = vmatmul.f32.gmra.mxu0 %v648
    %v856 = vpop.f32.mrf.mxu0
    %v857 = vadd.f32 0.0, %v856
    %858 = vmatmul.f32.gmra.mxu0 %v651
    %v859 = vpop.f32.mrf.mxu0
    %v860 = vadd.f32 0.0, %v859
    %861 = vmatmul.f32.gmra.mxu0 %v654
    %v862 = vpop.f32.mrf.mxu0
    %v863 = vadd.f32 0.0, %v862
    %864 = vmatmul.f32.gmra.mxu0 %v657
    %v865 = vpop.f32.mrf.mxu0
    %v866 = vadd.f32 0.0, %v865
    %867 = vmatmul.f32.gmra.mxu0 %v660
    %v868 = vpop.f32.mrf.mxu0
    %v869 = vadd.f32 0.0, %v868
    %870 = vmatmul.f32.gmra.mxu0 %v663
    %v871 = vpop.f32.mrf.mxu0
    %v872 = vadd.f32 0.0, %v871
    %873 = vmatmul.f32.gmra.mxu0 %v666
    %v874 = vpop.f32.mrf.mxu0
    %v875 = vadd.f32 0.0, %v874
    %876 = vmatmul.f32.gmra.mxu0 %v669
    %v877 = vpop.f32.mrf.mxu0
    %v878 = vadd.f32 0.0, %v877
    %879 = vmatmul.f32.gmra.mxu0 %v672
    %v880 = vpop.f32.mrf.mxu0
    %v881 = vadd.f32 0.0, %v880
    %882 = vmatmul.f32.gmra.mxu0 %v675
    %v883 = vpop.f32.mrf.mxu0
    %v884 = vadd.f32 0.0, %v883
    %885 = vmatmul.f32.gmra.mxu0 %v678
    %v886 = vpop.f32.mrf.mxu0
    %v887 = vadd.f32 0.0, %v886
    %888 = vmatmul.f32.gmra.mxu0 %v681
    %v889 = vpop.f32.mrf.mxu0
    %v890 = vadd.f32 0.0, %v889
    %891 = vmatmul.f32.gmra.mxu0 %v684
    %v892 = vpop.f32.mrf.mxu0
    %v893 = vadd.f32 0.0, %v892
    %894 = vmatmul.f32.gmra.mxu0 %v687
    %v895 = vpop.f32.mrf.mxu0
    %v896 = vadd.f32 0.0, %v895
    %897 = vmatmul.f32.gmra.mxu0 %v690
    %v898 = vpop.f32.mrf.mxu0
    %v899 = vadd.f32 0.0, %v898
    %900 = vmatmul.f32.gmra.mxu0 %v693
    %v901 = vpop.f32.mrf.mxu0
    %v902 = vadd.f32 0.0, %v901
    %903 = vmatmul.f32.gmra.mxu0 %v696
    %v904 = vpop.f32.mrf.mxu0
    %v905 = vadd.f32 0.0, %v904
    %906 = vmatmul.f32.gmra.mxu0 %v699
    %v907 = vpop.f32.mrf.mxu0
    %v908 = vadd.f32 0.0, %v907
    %909 = vmatmul.f32.gmra.mxu0 %v702
    %v910 = vpop.f32.mrf.mxu0
    %v911 = vadd.f32 0.0, %v910
    %912 = vmatmul.f32.gmra.mxu0 %v705
    %v913 = vpop.f32.mrf.mxu0
    %v914 = vadd.f32 0.0, %v913
    %915 = vmatmul.f32.gmra.mxu0 %v708
    %v916 = vpop.f32.mrf.mxu0
    %v917 = vadd.f32 0.0, %v916
    %918 = vmatmul.f32.gmra.mxu0 %v711
    %v919 = vpop.f32.mrf.mxu0
    %v920 = vadd.f32 0.0, %v919
    %921 = vmatmul.f32.gmra.mxu0 %v714
    %v922 = vpop.f32.mrf.mxu0
    %v923 = vadd.f32 0.0, %v922
    %924 = vmatmul.f32.gmra.mxu0 %v717
    %v925 = vpop.f32.mrf.mxu0
    %v926 = vadd.f32 0.0, %v925
    %927 = vmatmul.f32.gmra.mxu0 %v720
    %v928 = vpop.f32.mrf.mxu0
    %v929 = vadd.f32 0.0, %v928
    %930 = vmatmul.f32.gmra.mxu0 %v723
    %v931 = vpop.f32.mrf.mxu0
    %v932 = vadd.f32 0.0, %v931
    %933 = vmatmul.f32.gmra.mxu0 %v726
    %v934 = vpop.f32.mrf.mxu0
    %v935 = vadd.f32 0.0, %v934
    %936 = vmatmul.f32.gmra.mxu0 %v729
    %v937 = vpop.f32.mrf.mxu0
    %v938 = vadd.f32 0.0, %v937
    %939 = vmatmul.f32.gmra.mxu0 %v732
    %v940 = vpop.f32.mrf.mxu0
    %v941 = vadd.f32 0.0, %v940
    %942 = vmatmul.f32.gmra.mxu0 %v735
    %v943 = vpop.f32.mrf.mxu0
    %v944 = vadd.f32 0.0, %v943
    %945 = vmatmul.f32.gmra.mxu0 %v738
    %v946 = vpop.f32.mrf.mxu0
    %v947 = vadd.f32 0.0, %v946
    %948 = vmatmul.f32.gmra.mxu0 %v741
    %v949 = vpop.f32.mrf.mxu0
    %v950 = vadd.f32 0.0, %v949
    %951 = vmatmul.f32.gmra.mxu0 %v744
    %v952 = vpop.f32.mrf.mxu0
    %v953 = vadd.f32 0.0, %v952
    %954 = vmatmul.f32.gmra.mxu0 %v747
    %v955 = vpop.f32.mrf.mxu0
    %v956 = vadd.f32 0.0, %v955
    %957 = vmatmul.f32.gmra.mxu0 %v750
    %v958 = vpop.f32.mrf.mxu0
    %v959 = vadd.f32 0.0, %v958
    %960 = vmatmul.f32.gmra.mxu0 %v753
    %v961 = vpop.f32.mrf.mxu0
    %v962 = vadd.f32 0.0, %v961
    %963 = vmatmul.f32.gmra.mxu0 %v756
    %v964 = vpop.f32.mrf.mxu0
    %v965 = vadd.f32 0.0, %v964
    %966 = vmatmul.f32.gmra.mxu0 %v759
    %v967 = vpop.f32.mrf.mxu0
    %v968 = vadd.f32 0.0, %v967
    %969 = vmatmul.f32.gmra.mxu0 %v762
    %v970 = vpop.f32.mrf.mxu0
    %v971 = vadd.f32 0.0, %v970
    %972 = vmatmul.f32.gmra.mxu0 %v765
    %v973 = vpop.f32.mrf.mxu0
    %v974 = vadd.f32 0.0, %v973
    %975 = vmatmul.f32.gmra.mxu0 %v768
    %v976 = vpop.f32.mrf.mxu0
    %v977 = vadd.f32 0.0, %v976
    %978 = vmatmul.f32.gmra.mxu0 %v771
    %v979 = vpop.f32.mrf.mxu0
    %v980 = vadd.f32 0.0, %v979
    %981 = vmatmul.f32.gmra.mxu0 %v774
    %v982 = vpop.f32.mrf.mxu0
    %v983 = vadd.f32 0.0, %v982
    %984 = vmatmul.f32.gmra.mxu0 %v777
    %v985 = vpop.f32.mrf.mxu0
    %v986 = vadd.f32 0.0, %v985
    %987 = vmatmul.f32.gmra.mxu0 %v780
    %v988 = vpop.f32.mrf.mxu0
    %v989 = vadd.f32 0.0, %v988
    %990 = vmatmul.f32.gmra.mxu0 %v783
    %v991 = vpop.f32.mrf.mxu0
    %v992 = vadd.f32 0.0, %v991
    %993 = vmatmul.f32.gmra.mxu0 %v786
    %v994 = vpop.f32.mrf.mxu0
    %v995 = vadd.f32 0.0, %v994
    %996 = vmatmul.f32.gmra.mxu0 %v789
    %v997 = vpop.f32.mrf.mxu0
    %v998 = vadd.f32 0.0, %v997
    %999 = vmatmul.f32.gmra.mxu0 %v792
    %v1000 = vpop.f32.mrf.mxu0
    %v1001 = vadd.f32 0.0, %v1000
    %1002 = vmatmul.f32.gmra.mxu0 %v795
    %v1003 = vpop.f32.mrf.mxu0
    %v1004 = vadd.f32 0.0, %v1003
    %1005 = vmatmul.f32.gmra.mxu0 %v798
    %v1006 = vpop.f32.mrf.mxu0
    %v1007 = vadd.f32 0.0, %v1006
    %1008 = vmatmul.f32.gmra.mxu0 %v801
    %v1009 = vpop.f32.mrf.mxu0
    %v1010 = vadd.f32 0.0, %v1009
    %1011 = vmatmul.f32.gmra.mxu0 %v804
    %v1012 = vpop.f32.mrf.mxu0
    %v1013 = vadd.f32 0.0, %v1012
    %1014 = vmatmul.f32.gmra.mxu0 %v807
    %v1015 = vpop.f32.mrf.mxu0
    %v1016 = vadd.f32 0.0, %v1015
    %1017 = vmatmul.f32.gmra.mxu0 %v810
    %v1018 = vpop.f32.mrf.mxu0
    %v1019 = vadd.f32 0.0, %v1018
    %1020 = vmatmul.f32.gmra.mxu0 %v813
    %v1021 = vpop.f32.mrf.mxu0
    %v1022 = vadd.f32 0.0, %v1021
    %1023 = vmatmul.f32.gmra.mxu0 %v816
    %v1024 = vpop.f32.mrf.mxu0
    %v1025 = vadd.f32 0.0, %v1024
    %1026 = vdwg.mxu0
    %v1027 = vld [vmem:[#allocation8] sm:$0x3f]
    %v1029 = vsel %vm431, %v1027, 0
    %1031 = vmatpush.msra.mxu0 0.0
    %1032 = vmatpush.msra.mxu0 0.0
    %1033 = vmatpush.msra.mxu0 0.0
    %1034 = vmatpush.msra.mxu0 0.0
    %1035 = vmatpush.msra.mxu0 0.0
    %1036 = vmatpush.msra.mxu0 0.0
    %1037 = vmatpush.msra.mxu0 0.0
    %1038 = vmatpush.msra.mxu0 0.0
    %1039 = vmatpush.msra.mxu0 0.0
    %1040 = vmatpush.msra.mxu0 0.0
    %1041 = vmatpush.msra.mxu0 0.0
    %1042 = vmatpush.msra.mxu0 0.0
    %1043 = vmatpush.msra.mxu0 0.0
    %1044 = vmatpush.msra.mxu0 0.0
    %1045 = vmatpush.msra.mxu0 %v839
    %1046 = vmatpush.msra.mxu0 %v836
    %1047 = vmatmul.f32.gmra.mxu0 %v1029
    %v1048 = vpop.f32.mrf.mxu0
    %v1049 = vadd.f32 0.0, %v1048
    %1050 = vdwg.mxu0
    %1051 = vmatpush.msra.mxu0 0.0
    %1052 = vmatpush.msra.mxu0 0.0
    %1053 = vmatpush.msra.mxu0 0.0
    %1054 = vmatpush.msra.mxu0 0.0
    %1055 = vmatpush.msra.mxu0 0.0
    %1056 = vmatpush.msra.mxu0 0.0
    %1057 = vmatpush.msra.mxu0 0.0
    %1058 = vmatpush.msra.mxu0 0.0
    %1059 = vmatpush.msra.mxu0 0.0
    %1060 = vmatpush.msra.mxu0 0.0
    %1061 = vmatpush.msra.mxu0 0.0
    %1062 = vmatpush.msra.mxu0 0.0
    %1063 = vmatpush.msra.mxu0 0.0
    %1064 = vmatpush.msra.mxu0 0.0
    %1065 = vmatpush.msra.mxu0 %v845
    %1066 = vmatpush.msra.mxu0 %v842
    %1067 = vmatmul.f32.gmra.mxu0 %v1029
    %v1068 = vpop.f32.mrf.mxu0
    %v1069 = vadd.f32 0.0, %v1068
    %1070 = vdwg.mxu0
    %1071 = vmatpush.msra.mxu0 0.0
    %1072 = vmatpush.msra.mxu0 0.0
    %1073 = vmatpush.msra.mxu0 0.0
    %1074 = vmatpush.msra.mxu0 0.0
    %1075 = vmatpush.msra.mxu0 0.0
    %1076 = vmatpush.msra.mxu0 0.0
    %1077 = vmatpush.msra.mxu0 0.0
    %1078 = vmatpush.msra.mxu0 0.0
    %1079 = vmatpush.msra.mxu0 0.0
    %1080 = vmatpush.msra.mxu0 0.0
    %1081 = vmatpush.msra.mxu0 0.0
    %1082 = vmatpush.msra.mxu0 0.0
    %1083 = vmatpush.msra.mxu0 0.0
    %1084 = vmatpush.msra.mxu0 0.0
    %1085 = vmatpush.msra.mxu0 %v851
    %1086 = vmatpush.msra.mxu0 %v848
    %1087 = vmatmul.f32.gmra.mxu0 %v1029
    %v1088 = vpop.f32.mrf.mxu0
    %v1089 = vadd.f32 0.0, %v1088
    %1090 = vdwg.mxu0
    %1091 = vmatpush.msra.mxu0 0.0
    %1092 = vmatpush.msra.mxu0 0.0
    %1093 = vmatpush.msra.mxu0 0.0
    %1094 = vmatpush.msra.mxu0 0.0
    %1095 = vmatpush.msra.mxu0 0.0
    %1096 = vmatpush.msra.mxu0 0.0
    %1097 = vmatpush.msra.mxu0 0.0
    %1098 = vmatpush.msra.mxu0 0.0
    %1099 = vmatpush.msra.mxu0 0.0
    %1100 = vmatpush.msra.mxu0 0.0
    %1101 = vmatpush.msra.mxu0 0.0
    %1102 = vmatpush.msra.mxu0 0.0
    %1103 = vmatpush.msra.mxu0 0.0
    %1104 = vmatpush.msra.mxu0 0.0
    %1105 = vmatpush.msra.mxu0 %v857
    %1106 = vmatpush.msra.mxu0 %v854
    %1107 = vmatmul.f32.gmra.mxu0 %v1029
    %v1108 = vpop.f32.mrf.mxu0
    %v1109 = vadd.f32 0.0, %v1108
    %1110 = vdwg.mxu0
    %1111 = vmatpush.msra.mxu0 0.0
    %1112 = vmatpush.msra.mxu0 0.0
    %1113 = vmatpush.msra.mxu0 0.0
    %1114 = vmatpush.msra.mxu0 0.0
    %1115 = vmatpush.msra.mxu0 0.0
    %1116 = vmatpush.msra.mxu0 0.0
    %1117 = vmatpush.msra.mxu0 0.0
    %1118 = vmatpush.msra.mxu0 0.0
    %1119 = vmatpush.msra.mxu0 0.0
    %1120 = vmatpush.msra.mxu0 0.0
    %1121 = vmatpush.msra.mxu0 0.0
    %1122 = vmatpush.msra.mxu0 0.0
    %1123 = vmatpush.msra.mxu0 0.0
    %1124 = vmatpush.msra.mxu0 0.0
    %1125 = vmatpush.msra.mxu0 %v863
    %1126 = vmatpush.msra.mxu0 %v860
    %1127 = vmatmul.f32.gmra.mxu0 %v1029
    %v1128 = vpop.f32.mrf.mxu0
    %v1129 = vadd.f32 0.0, %v1128
    %1130 = vdwg.mxu0
    %1131 = vmatpush.msra.mxu0 0.0
    %1132 = vmatpush.msra.mxu0 0.0
    %1133 = vmatpush.msra.mxu0 0.0
    %1134 = vmatpush.msra.mxu0 0.0
    %1135 = vmatpush.msra.mxu0 0.0
    %1136 = vmatpush.msra.mxu0 0.0
    %1137 = vmatpush.msra.mxu0 0.0
    %1138 = vmatpush.msra.mxu0 0.0
    %1139 = vmatpush.msra.mxu0 0.0
    %1140 = vmatpush.msra.mxu0 0.0
    %1141 = vmatpush.msra.mxu0 0.0
    %1142 = vmatpush.msra.mxu0 0.0
    %1143 = vmatpush.msra.mxu0 0.0
    %1144 = vmatpush.msra.mxu0 0.0
    %1145 = vmatpush.msra.mxu0 %v869
    %1146 = vmatpush.msra.mxu0 %v866
    %1147 = vmatmul.f32.gmra.mxu0 %v1029
    %v1148 = vpop.f32.mrf.mxu0
    %v1149 = vadd.f32 0.0, %v1148
    %1150 = vdwg.mxu0
    %1151 = vmatpush.msra.mxu0 0.0
    %1152 = vmatpush.msra.mxu0 0.0
    %1153 = vmatpush.msra.mxu0 0.0
    %1154 = vmatpush.msra.mxu0 0.0
    %1155 = vmatpush.msra.mxu0 0.0
    %1156 = vmatpush.msra.mxu0 0.0
    %1157 = vmatpush.msra.mxu0 0.0
    %1158 = vmatpush.msra.mxu0 0.0
    %1159 = vmatpush.msra.mxu0 0.0
    %1160 = vmatpush.msra.mxu0 0.0
    %1161 = vmatpush.msra.mxu0 0.0
    %1162 = vmatpush.msra.mxu0 0.0
    %1163 = vmatpush.msra.mxu0 0.0
    %1164 = vmatpush.msra.mxu0 0.0
    %1165 = vmatpush.msra.mxu0 %v875
    %1166 = vmatpush.msra.mxu0 %v872
    %1167 = vmatmul.f32.gmra.mxu0 %v1029
    %v1168 = vpop.f32.mrf.mxu0
    %v1169 = vadd.f32 0.0, %v1168
    %1170 = vdwg.mxu0
    %1171 = vmatpush.msra.mxu0 0.0
    %1172 = vmatpush.msra.mxu0 0.0
    %1173 = vmatpush.msra.mxu0 0.0
    %1174 = vmatpush.msra.mxu0 0.0
    %1175 = vmatpush.msra.mxu0 0.0
    %1176 = vmatpush.msra.mxu0 0.0
    %1177 = vmatpush.msra.mxu0 0.0
    %1178 = vmatpush.msra.mxu0 0.0
    %1179 = vmatpush.msra.mxu0 0.0
    %1180 = vmatpush.msra.mxu0 0.0
    %1181 = vmatpush.msra.mxu0 0.0
    %1182 = vmatpush.msra.mxu0 0.0
    %1183 = vmatpush.msra.mxu0 0.0
    %1184 = vmatpush.msra.mxu0 0.0
    %1185 = vmatpush.msra.mxu0 %v881
    %1186 = vmatpush.msra.mxu0 %v878
    %1187 = vmatmul.f32.gmra.mxu0 %v1029
    %v1188 = vpop.f32.mrf.mxu0
    %v1189 = vadd.f32 0.0, %v1188
    %1190 = vdwg.mxu0
    %1191 = vmatpush.msra.mxu0 0.0
    %1192 = vmatpush.msra.mxu0 0.0
    %1193 = vmatpush.msra.mxu0 0.0
    %1194 = vmatpush.msra.mxu0 0.0
    %1195 = vmatpush.msra.mxu0 0.0
    %1196 = vmatpush.msra.mxu0 0.0
    %1197 = vmatpush.msra.mxu0 0.0
    %1198 = vmatpush.msra.mxu0 0.0
    %1199 = vmatpush.msra.mxu0 0.0
    %1200 = vmatpush.msra.mxu0 0.0
    %1201 = vmatpush.msra.mxu0 0.0
    %1202 = vmatpush.msra.mxu0 0.0
    %1203 = vmatpush.msra.mxu0 0.0
    %1204 = vmatpush.msra.mxu0 0.0
    %1205 = vmatpush.msra.mxu0 %v887
    %1206 = vmatpush.msra.mxu0 %v884
    %1207 = vmatmul.f32.gmra.mxu0 %v1029
    %v1208 = vpop.f32.mrf.mxu0
    %v1209 = vadd.f32 0.0, %v1208
    %1210 = vdwg.mxu0
    %1211 = vmatpush.msra.mxu0 0.0
    %1212 = vmatpush.msra.mxu0 0.0
    %1213 = vmatpush.msra.mxu0 0.0
    %1214 = vmatpush.msra.mxu0 0.0
    %1215 = vmatpush.msra.mxu0 0.0
    %1216 = vmatpush.msra.mxu0 0.0
    %1217 = vmatpush.msra.mxu0 0.0
    %1218 = vmatpush.msra.mxu0 0.0
    %1219 = vmatpush.msra.mxu0 0.0
    %1220 = vmatpush.msra.mxu0 0.0
    %1221 = vmatpush.msra.mxu0 0.0
    %1222 = vmatpush.msra.mxu0 0.0
    %1223 = vmatpush.msra.mxu0 0.0
    %1224 = vmatpush.msra.mxu0 0.0
    %1225 = vmatpush.msra.mxu0 %v893
    %1226 = vmatpush.msra.mxu0 %v890
    %1227 = vmatmul.f32.gmra.mxu0 %v1029
    %v1228 = vpop.f32.mrf.mxu0
    %v1229 = vadd.f32 0.0, %v1228
    %1230 = vdwg.mxu0
    %1231 = vmatpush.msra.mxu0 0.0
    %1232 = vmatpush.msra.mxu0 0.0
    %1233 = vmatpush.msra.mxu0 0.0
    %1234 = vmatpush.msra.mxu0 0.0
    %1235 = vmatpush.msra.mxu0 0.0
    %1236 = vmatpush.msra.mxu0 0.0
    %1237 = vmatpush.msra.mxu0 0.0
    %1238 = vmatpush.msra.mxu0 0.0
    %1239 = vmatpush.msra.mxu0 0.0
    %1240 = vmatpush.msra.mxu0 0.0
    %1241 = vmatpush.msra.mxu0 0.0
    %1242 = vmatpush.msra.mxu0 0.0
    %1243 = vmatpush.msra.mxu0 0.0
    %1244 = vmatpush.msra.mxu0 0.0
    %1245 = vmatpush.msra.mxu0 %v899
    %1246 = vmatpush.msra.mxu0 %v896
    %1247 = vmatmul.f32.gmra.mxu0 %v1029
    %v1248 = vpop.f32.mrf.mxu0
    %v1249 = vadd.f32 0.0, %v1248
    %1250 = vdwg.mxu0
    %1251 = vmatpush.msra.mxu0 0.0
    %1252 = vmatpush.msra.mxu0 0.0
    %1253 = vmatpush.msra.mxu0 0.0
    %1254 = vmatpush.msra.mxu0 0.0
    %1255 = vmatpush.msra.mxu0 0.0
    %1256 = vmatpush.msra.mxu0 0.0
    %1257 = vmatpush.msra.mxu0 0.0
    %1258 = vmatpush.msra.mxu0 0.0
    %1259 = vmatpush.msra.mxu0 0.0
    %1260 = vmatpush.msra.mxu0 0.0
    %1261 = vmatpush.msra.mxu0 0.0
    %1262 = vmatpush.msra.mxu0 0.0
    %1263 = vmatpush.msra.mxu0 0.0
    %1264 = vmatpush.msra.mxu0 0.0
    %1265 = vmatpush.msra.mxu0 %v905
    %1266 = vmatpush.msra.mxu0 %v902
    %1267 = vmatmul.f32.gmra.mxu0 %v1029
    %v1268 = vpop.f32.mrf.mxu0
    %v1269 = vadd.f32 0.0, %v1268
    %1270 = vdwg.mxu0
    %1271 = vmatpush.msra.mxu0 0.0
    %1272 = vmatpush.msra.mxu0 0.0
    %1273 = vmatpush.msra.mxu0 0.0
    %1274 = vmatpush.msra.mxu0 0.0
    %1275 = vmatpush.msra.mxu0 0.0
    %1276 = vmatpush.msra.mxu0 0.0
    %1277 = vmatpush.msra.mxu0 0.0
    %1278 = vmatpush.msra.mxu0 0.0
    %1279 = vmatpush.msra.mxu0 0.0
    %1280 = vmatpush.msra.mxu0 0.0
    %1281 = vmatpush.msra.mxu0 0.0
    %1282 = vmatpush.msra.mxu0 0.0
    %1283 = vmatpush.msra.mxu0 0.0
    %1284 = vmatpush.msra.mxu0 0.0
    %1285 = vmatpush.msra.mxu0 %v911
    %1286 = vmatpush.msra.mxu0 %v908
    %1287 = vmatmul.f32.gmra.mxu0 %v1029
    %v1288 = vpop.f32.mrf.mxu0
    %v1289 = vadd.f32 0.0, %v1288
    %1290 = vdwg.mxu0
    %1291 = vmatpush.msra.mxu0 0.0
    %1292 = vmatpush.msra.mxu0 0.0
    %1293 = vmatpush.msra.mxu0 0.0
    %1294 = vmatpush.msra.mxu0 0.0
    %1295 = vmatpush.msra.mxu0 0.0
    %1296 = vmatpush.msra.mxu0 0.0
    %1297 = vmatpush.msra.mxu0 0.0
    %1298 = vmatpush.msra.mxu0 0.0
    %1299 = vmatpush.msra.mxu0 0.0
    %1300 = vmatpush.msra.mxu0 0.0
    %1301 = vmatpush.msra.mxu0 0.0
    %1302 = vmatpush.msra.mxu0 0.0
    %1303 = vmatpush.msra.mxu0 0.0
    %1304 = vmatpush.msra.mxu0 0.0
    %1305 = vmatpush.msra.mxu0 %v917
    %1306 = vmatpush.msra.mxu0 %v914
    %1307 = vmatmul.f32.gmra.mxu0 %v1029
    %v1308 = vpop.f32.mrf.mxu0
    %v1309 = vadd.f32 0.0, %v1308
    %1310 = vdwg.mxu0
    %1311 = vmatpush.msra.mxu0 0.0
    %1312 = vmatpush.msra.mxu0 0.0
    %1313 = vmatpush.msra.mxu0 0.0
    %1314 = vmatpush.msra.mxu0 0.0
    %1315 = vmatpush.msra.mxu0 0.0
    %1316 = vmatpush.msra.mxu0 0.0
    %1317 = vmatpush.msra.mxu0 0.0
    %1318 = vmatpush.msra.mxu0 0.0
    %1319 = vmatpush.msra.mxu0 0.0
    %1320 = vmatpush.msra.mxu0 0.0
    %1321 = vmatpush.msra.mxu0 0.0
    %1322 = vmatpush.msra.mxu0 0.0
    %1323 = vmatpush.msra.mxu0 0.0
    %1324 = vmatpush.msra.mxu0 0.0
    %1325 = vmatpush.msra.mxu0 %v923
    %1326 = vmatpush.msra.mxu0 %v920
    %1327 = vmatmul.f32.gmra.mxu0 %v1029
    %v1328 = vpop.f32.mrf.mxu0
    %v1329 = vadd.f32 0.0, %v1328
    %1330 = vdwg.mxu0
    %1331 = vmatpush.msra.mxu0 0.0
    %1332 = vmatpush.msra.mxu0 0.0
    %1333 = vmatpush.msra.mxu0 0.0
    %1334 = vmatpush.msra.mxu0 0.0
    %1335 = vmatpush.msra.mxu0 0.0
    %1336 = vmatpush.msra.mxu0 0.0
    %1337 = vmatpush.msra.mxu0 0.0
    %1338 = vmatpush.msra.mxu0 0.0
    %1339 = vmatpush.msra.mxu0 0.0
    %1340 = vmatpush.msra.mxu0 0.0
    %1341 = vmatpush.msra.mxu0 0.0
    %1342 = vmatpush.msra.mxu0 0.0
    %1343 = vmatpush.msra.mxu0 0.0
    %1344 = vmatpush.msra.mxu0 0.0
    %1345 = vmatpush.msra.mxu0 %v929
    %1346 = vmatpush.msra.mxu0 %v926
    %1347 = vmatmul.f32.gmra.mxu0 %v1029
    %v1348 = vpop.f32.mrf.mxu0
    %v1349 = vadd.f32 0.0, %v1348
    %1350 = vdwg.mxu0
    %1351 = vmatpush.msra.mxu0 0.0
    %1352 = vmatpush.msra.mxu0 0.0
    %1353 = vmatpush.msra.mxu0 0.0
    %1354 = vmatpush.msra.mxu0 0.0
    %1355 = vmatpush.msra.mxu0 0.0
    %1356 = vmatpush.msra.mxu0 0.0
    %1357 = vmatpush.msra.mxu0 0.0
    %1358 = vmatpush.msra.mxu0 0.0
    %1359 = vmatpush.msra.mxu0 0.0
    %1360 = vmatpush.msra.mxu0 0.0
    %1361 = vmatpush.msra.mxu0 0.0
    %1362 = vmatpush.msra.mxu0 0.0
    %1363 = vmatpush.msra.mxu0 0.0
    %1364 = vmatpush.msra.mxu0 0.0
    %1365 = vmatpush.msra.mxu0 %v935
    %1366 = vmatpush.msra.mxu0 %v932
    %1367 = vmatmul.f32.gmra.mxu0 %v1029
    %v1368 = vpop.f32.mrf.mxu0
    %v1369 = vadd.f32 0.0, %v1368
    %1370 = vdwg.mxu0
    %1371 = vmatpush.msra.mxu0 0.0
    %1372 = vmatpush.msra.mxu0 0.0
    %1373 = vmatpush.msra.mxu0 0.0
    %1374 = vmatpush.msra.mxu0 0.0
    %1375 = vmatpush.msra.mxu0 0.0
    %1376 = vmatpush.msra.mxu0 0.0
    %1377 = vmatpush.msra.mxu0 0.0
    %1378 = vmatpush.msra.mxu0 0.0
    %1379 = vmatpush.msra.mxu0 0.0
    %1380 = vmatpush.msra.mxu0 0.0
    %1381 = vmatpush.msra.mxu0 0.0
    %1382 = vmatpush.msra.mxu0 0.0
    %1383 = vmatpush.msra.mxu0 0.0
    %1384 = vmatpush.msra.mxu0 0.0
    %1385 = vmatpush.msra.mxu0 %v941
    %1386 = vmatpush.msra.mxu0 %v938
    %1387 = vmatmul.f32.gmra.mxu0 %v1029
    %v1388 = vpop.f32.mrf.mxu0
    %v1389 = vadd.f32 0.0, %v1388
    %1390 = vdwg.mxu0
    %1391 = vmatpush.msra.mxu0 0.0
    %1392 = vmatpush.msra.mxu0 0.0
    %1393 = vmatpush.msra.mxu0 0.0
    %1394 = vmatpush.msra.mxu0 0.0
    %1395 = vmatpush.msra.mxu0 0.0
    %1396 = vmatpush.msra.mxu0 0.0
    %1397 = vmatpush.msra.mxu0 0.0
    %1398 = vmatpush.msra.mxu0 0.0
    %1399 = vmatpush.msra.mxu0 0.0
    %1400 = vmatpush.msra.mxu0 0.0
    %1401 = vmatpush.msra.mxu0 0.0
    %1402 = vmatpush.msra.mxu0 0.0
    %1403 = vmatpush.msra.mxu0 0.0
    %1404 = vmatpush.msra.mxu0 0.0
    %1405 = vmatpush.msra.mxu0 %v947
    %1406 = vmatpush.msra.mxu0 %v944
    %1407 = vmatmul.f32.gmra.mxu0 %v1029
    %v1408 = vpop.f32.mrf.mxu0
    %v1409 = vadd.f32 0.0, %v1408
    %1410 = vdwg.mxu0
    %1411 = vmatpush.msra.mxu0 0.0
    %1412 = vmatpush.msra.mxu0 0.0
    %1413 = vmatpush.msra.mxu0 0.0
    %1414 = vmatpush.msra.mxu0 0.0
    %1415 = vmatpush.msra.mxu0 0.0
    %1416 = vmatpush.msra.mxu0 0.0
    %1417 = vmatpush.msra.mxu0 0.0
    %1418 = vmatpush.msra.mxu0 0.0
    %1419 = vmatpush.msra.mxu0 0.0
    %1420 = vmatpush.msra.mxu0 0.0
    %1421 = vmatpush.msra.mxu0 0.0
    %1422 = vmatpush.msra.mxu0 0.0
    %1423 = vmatpush.msra.mxu0 0.0
    %1424 = vmatpush.msra.mxu0 0.0
    %1425 = vmatpush.msra.mxu0 %v953
    %1426 = vmatpush.msra.mxu0 %v950
    %1427 = vmatmul.f32.gmra.mxu0 %v1029
    %v1428 = vpop.f32.mrf.mxu0
    %v1429 = vadd.f32 0.0, %v1428
    %1430 = vdwg.mxu0
    %1431 = vmatpush.msra.mxu0 0.0
    %1432 = vmatpush.msra.mxu0 0.0
    %1433 = vmatpush.msra.mxu0 0.0
    %1434 = vmatpush.msra.mxu0 0.0
    %1435 = vmatpush.msra.mxu0 0.0
    %1436 = vmatpush.msra.mxu0 0.0
    %1437 = vmatpush.msra.mxu0 0.0
    %1438 = vmatpush.msra.mxu0 0.0
    %1439 = vmatpush.msra.mxu0 0.0
    %1440 = vmatpush.msra.mxu0 0.0
    %1441 = vmatpush.msra.mxu0 0.0
    %1442 = vmatpush.msra.mxu0 0.0
    %1443 = vmatpush.msra.mxu0 0.0
    %1444 = vmatpush.msra.mxu0 0.0
    %1445 = vmatpush.msra.mxu0 %v959
    %1446 = vmatpush.msra.mxu0 %v956
    %1447 = vmatmul.f32.gmra.mxu0 %v1029
    %v1448 = vpop.f32.mrf.mxu0
    %v1449 = vadd.f32 0.0, %v1448
    %1450 = vdwg.mxu0
    %1451 = vmatpush.msra.mxu0 0.0
    %1452 = vmatpush.msra.mxu0 0.0
    %1453 = vmatpush.msra.mxu0 0.0
    %1454 = vmatpush.msra.mxu0 0.0
    %1455 = vmatpush.msra.mxu0 0.0
    %1456 = vmatpush.msra.mxu0 0.0
    %1457 = vmatpush.msra.mxu0 0.0
    %1458 = vmatpush.msra.mxu0 0.0
    %1459 = vmatpush.msra.mxu0 0.0
    %1460 = vmatpush.msra.mxu0 0.0
    %1461 = vmatpush.msra.mxu0 0.0
    %1462 = vmatpush.msra.mxu0 0.0
    %1463 = vmatpush.msra.mxu0 0.0
    %1464 = vmatpush.msra.mxu0 0.0
    %1465 = vmatpush.msra.mxu0 %v965
    %1466 = vmatpush.msra.mxu0 %v962
    %1467 = vmatmul.f32.gmra.mxu0 %v1029
    %v1468 = vpop.f32.mrf.mxu0
    %v1469 = vadd.f32 0.0, %v1468
    %1470 = vdwg.mxu0
    %1471 = vmatpush.msra.mxu0 0.0
    %1472 = vmatpush.msra.mxu0 0.0
    %1473 = vmatpush.msra.mxu0 0.0
    %1474 = vmatpush.msra.mxu0 0.0
    %1475 = vmatpush.msra.mxu0 0.0
    %1476 = vmatpush.msra.mxu0 0.0
    %1477 = vmatpush.msra.mxu0 0.0
    %1478 = vmatpush.msra.mxu0 0.0
    %1479 = vmatpush.msra.mxu0 0.0
    %1480 = vmatpush.msra.mxu0 0.0
    %1481 = vmatpush.msra.mxu0 0.0
    %1482 = vmatpush.msra.mxu0 0.0
    %1483 = vmatpush.msra.mxu0 0.0
    %1484 = vmatpush.msra.mxu0 0.0
    %1485 = vmatpush.msra.mxu0 %v971
    %1486 = vmatpush.msra.mxu0 %v968
    %1487 = vmatmul.f32.gmra.mxu0 %v1029
    %v1488 = vpop.f32.mrf.mxu0
    %v1489 = vadd.f32 0.0, %v1488
    %1490 = vdwg.mxu0
    %1491 = vmatpush.msra.mxu0 0.0
    %1492 = vmatpush.msra.mxu0 0.0
    %1493 = vmatpush.msra.mxu0 0.0
    %1494 = vmatpush.msra.mxu0 0.0
    %1495 = vmatpush.msra.mxu0 0.0
    %1496 = vmatpush.msra.mxu0 0.0
    %1497 = vmatpush.msra.mxu0 0.0
    %1498 = vmatpush.msra.mxu0 0.0
    %1499 = vmatpush.msra.mxu0 0.0
    %1500 = vmatpush.msra.mxu0 0.0
    %1501 = vmatpush.msra.mxu0 0.0
    %1502 = vmatpush.msra.mxu0 0.0
    %1503 = vmatpush.msra.mxu0 0.0
    %1504 = vmatpush.msra.mxu0 0.0
    %1505 = vmatpush.msra.mxu0 %v977
    %1506 = vmatpush.msra.mxu0 %v974
    %1507 = vmatmul.f32.gmra.mxu0 %v1029
    %v1508 = vpop.f32.mrf.mxu0
    %v1509 = vadd.f32 0.0, %v1508
    %1510 = vdwg.mxu0
    %1511 = vmatpush.msra.mxu0 0.0
    %1512 = vmatpush.msra.mxu0 0.0
    %1513 = vmatpush.msra.mxu0 0.0
    %1514 = vmatpush.msra.mxu0 0.0
    %1515 = vmatpush.msra.mxu0 0.0
    %1516 = vmatpush.msra.mxu0 0.0
    %1517 = vmatpush.msra.mxu0 0.0
    %1518 = vmatpush.msra.mxu0 0.0
    %1519 = vmatpush.msra.mxu0 0.0
    %1520 = vmatpush.msra.mxu0 0.0
    %1521 = vmatpush.msra.mxu0 0.0
    %1522 = vmatpush.msra.mxu0 0.0
    %1523 = vmatpush.msra.mxu0 0.0
    %1524 = vmatpush.msra.mxu0 0.0
    %1525 = vmatpush.msra.mxu0 %v983
    %1526 = vmatpush.msra.mxu0 %v980
    %1527 = vmatmul.f32.gmra.mxu0 %v1029
    %v1528 = vpop.f32.mrf.mxu0
    %v1529 = vadd.f32 0.0, %v1528
    %1530 = vdwg.mxu0
    %1531 = vmatpush.msra.mxu0 0.0
    %1532 = vmatpush.msra.mxu0 0.0
    %1533 = vmatpush.msra.mxu0 0.0
    %1534 = vmatpush.msra.mxu0 0.0
    %1535 = vmatpush.msra.mxu0 0.0
    %1536 = vmatpush.msra.mxu0 0.0
    %1537 = vmatpush.msra.mxu0 0.0
    %1538 = vmatpush.msra.mxu0 0.0
    %1539 = vmatpush.msra.mxu0 0.0
    %1540 = vmatpush.msra.mxu0 0.0
    %1541 = vmatpush.msra.mxu0 0.0
    %1542 = vmatpush.msra.mxu0 0.0
    %1543 = vmatpush.msra.mxu0 0.0
    %1544 = vmatpush.msra.mxu0 0.0
    %1545 = vmatpush.msra.mxu0 %v989
    %1546 = vmatpush.msra.mxu0 %v986
    %1547 = vmatmul.f32.gmra.mxu0 %v1029
    %v1548 = vpop.f32.mrf.mxu0
    %v1549 = vadd.f32 0.0, %v1548
    %1550 = vdwg.mxu0
    %1551 = vmatpush.msra.mxu0 0.0
    %1552 = vmatpush.msra.mxu0 0.0
    %1553 = vmatpush.msra.mxu0 0.0
    %1554 = vmatpush.msra.mxu0 0.0
    %1555 = vmatpush.msra.mxu0 0.0
    %1556 = vmatpush.msra.mxu0 0.0
    %1557 = vmatpush.msra.mxu0 0.0
    %1558 = vmatpush.msra.mxu0 0.0
    %1559 = vmatpush.msra.mxu0 0.0
    %1560 = vmatpush.msra.mxu0 0.0
    %1561 = vmatpush.msra.mxu0 0.0
    %1562 = vmatpush.msra.mxu0 0.0
    %1563 = vmatpush.msra.mxu0 0.0
    %1564 = vmatpush.msra.mxu0 0.0
    %1565 = vmatpush.msra.mxu0 %v995
    %1566 = vmatpush.msra.mxu0 %v992
    %1567 = vmatmul.f32.gmra.mxu0 %v1029
    %v1568 = vpop.f32.mrf.mxu0
    %v1569 = vadd.f32 0.0, %v1568
    %1570 = vdwg.mxu0
    %1571 = vmatpush.msra.mxu0 0.0
    %1572 = vmatpush.msra.mxu0 0.0
    %1573 = vmatpush.msra.mxu0 0.0
    %1574 = vmatpush.msra.mxu0 0.0
    %1575 = vmatpush.msra.mxu0 0.0
    %1576 = vmatpush.msra.mxu0 0.0
    %1577 = vmatpush.msra.mxu0 0.0
    %1578 = vmatpush.msra.mxu0 0.0
    %1579 = vmatpush.msra.mxu0 0.0
    %1580 = vmatpush.msra.mxu0 0.0
    %1581 = vmatpush.msra.mxu0 0.0
    %1582 = vmatpush.msra.mxu0 0.0
    %1583 = vmatpush.msra.mxu0 0.0
    %1584 = vmatpush.msra.mxu0 0.0
    %1585 = vmatpush.msra.mxu0 %v1001
    %1586 = vmatpush.msra.mxu0 %v998
    %1587 = vmatmul.f32.gmra.mxu0 %v1029
    %v1588 = vpop.f32.mrf.mxu0
    %v1589 = vadd.f32 0.0, %v1588
    %1590 = vdwg.mxu0
    %1591 = vmatpush.msra.mxu0 0.0
    %1592 = vmatpush.msra.mxu0 0.0
    %1593 = vmatpush.msra.mxu0 0.0
    %1594 = vmatpush.msra.mxu0 0.0
    %1595 = vmatpush.msra.mxu0 0.0
    %1596 = vmatpush.msra.mxu0 0.0
    %1597 = vmatpush.msra.mxu0 0.0
    %1598 = vmatpush.msra.mxu0 0.0
    %1599 = vmatpush.msra.mxu0 0.0
    %1600 = vmatpush.msra.mxu0 0.0
    %1601 = vmatpush.msra.mxu0 0.0
    %1602 = vmatpush.msra.mxu0 0.0
    %1603 = vmatpush.msra.mxu0 0.0
    %1604 = vmatpush.msra.mxu0 0.0
    %1605 = vmatpush.msra.mxu0 %v1007
    %1606 = vmatpush.msra.mxu0 %v1004
    %1607 = vmatmul.f32.gmra.mxu0 %v1029
    %v1608 = vpop.f32.mrf.mxu0
    %v1609 = vadd.f32 0.0, %v1608
    %1610 = vdwg.mxu0
    %1611 = vmatpush.msra.mxu0 0.0
    %1612 = vmatpush.msra.mxu0 0.0
    %1613 = vmatpush.msra.mxu0 0.0
    %1614 = vmatpush.msra.mxu0 0.0
    %1615 = vmatpush.msra.mxu0 0.0
    %1616 = vmatpush.msra.mxu0 0.0
    %1617 = vmatpush.msra.mxu0 0.0
    %1618 = vmatpush.msra.mxu0 0.0
    %1619 = vmatpush.msra.mxu0 0.0
    %1620 = vmatpush.msra.mxu0 0.0
    %1621 = vmatpush.msra.mxu0 0.0
    %1622 = vmatpush.msra.mxu0 0.0
    %1623 = vmatpush.msra.mxu0 0.0
    %1624 = vmatpush.msra.mxu0 0.0
    %1625 = vmatpush.msra.mxu0 %v1013
    %1626 = vmatpush.msra.mxu0 %v1010
    %1627 = vmatmul.f32.gmra.mxu0 %v1029
    %v1628 = vpop.f32.mrf.mxu0
    %v1629 = vadd.f32 0.0, %v1628
    %1630 = vdwg.mxu0
    %1631 = vmatpush.msra.mxu0 0.0
    %1632 = vmatpush.msra.mxu0 0.0
    %1633 = vmatpush.msra.mxu0 0.0
    %1634 = vmatpush.msra.mxu0 0.0
    %1635 = vmatpush.msra.mxu0 0.0
    %1636 = vmatpush.msra.mxu0 0.0
    %1637 = vmatpush.msra.mxu0 0.0
    %1638 = vmatpush.msra.mxu0 0.0
    %1639 = vmatpush.msra.mxu0 0.0
    %1640 = vmatpush.msra.mxu0 0.0
    %1641 = vmatpush.msra.mxu0 0.0
    %1642 = vmatpush.msra.mxu0 0.0
    %1643 = vmatpush.msra.mxu0 0.0
    %1644 = vmatpush.msra.mxu0 0.0
    %1645 = vmatpush.msra.mxu0 %v1019
    %1646 = vmatpush.msra.mxu0 %v1016
    %1647 = vmatmul.f32.gmra.mxu0 %v1029
    %v1648 = vpop.f32.mrf.mxu0
    %v1649 = vadd.f32 0.0, %v1648
    %1650 = vdwg.mxu0
    %1651 = vmatpush.msra.mxu0 0.0
    %1652 = vmatpush.msra.mxu0 0.0
    %1653 = vmatpush.msra.mxu0 0.0
    %1654 = vmatpush.msra.mxu0 0.0
    %1655 = vmatpush.msra.mxu0 0.0
    %1656 = vmatpush.msra.mxu0 0.0
    %1657 = vmatpush.msra.mxu0 0.0
    %1658 = vmatpush.msra.mxu0 0.0
    %1659 = vmatpush.msra.mxu0 0.0
    %1660 = vmatpush.msra.mxu0 0.0
    %1661 = vmatpush.msra.mxu0 0.0
    %1662 = vmatpush.msra.mxu0 0.0
    %1663 = vmatpush.msra.mxu0 0.0
    %1664 = vmatpush.msra.mxu0 0.0
    %1665 = vmatpush.msra.mxu0 %v1025
    %1666 = vmatpush.msra.mxu0 %v1022
    %1667 = vmatmul.f32.gmra.mxu0 %v1029
    %v1668 = vpop.f32.mrf.mxu0
    %v1669 = vadd.f32 0.0, %v1668
    %1670 = vdwg.mxu0
    %v1671 = vadd.f32 %v1049, 0.5
    %v1672 = vadd.f32 %v1069, 0.5
    %v1673 = vadd.f32 %v1089, 0.5
    %v1674 = vadd.f32 %v1109, 0.5
    %v1675 = vadd.f32 %v1129, 0.5
    %v1676 = vadd.f32 %v1149, 0.5
    %v1677 = vadd.f32 %v1169, 0.5
    %v1678 = vadd.f32 %v1189, 0.5
    %v1679 = vadd.f32 %v1209, 0.5
    %v1680 = vadd.f32 %v1229, 0.5
    %v1681 = vadd.f32 %v1249, 0.5
    %v1682 = vadd.f32 %v1269, 0.5
    %v1683 = vadd.f32 %v1289, 0.5
    %v1684 = vadd.f32 %v1309, 0.5
    %v1685 = vadd.f32 %v1329, 0.5
    %v1686 = vadd.f32 %v1349, 0.5
    %v1687 = vsub.f32 %v1369, %v1529
    %v1688 = vsub.f32 %v1389, %v1549
    %v1689 = vsub.f32 %v1409, %v1569
    %v1690 = vsub.f32 %v1429, %v1589
    %v1691 = vsub.f32 %v1449, %v1609
    %v1692 = vsub.f32 %v1469, %v1629
    %v1693 = vsub.f32 %v1489, %v1649
    %v1694 = vsub.f32 %v1509, %v1669
    %v1695 = vmul.f32 %v1687, 0.25
    %v1696 = vmul.f32 %v1688, 0.25
    %v1697 = vmul.f32 %v1689, 0.25
    %v1698 = vmul.f32 %v1690, 0.25
    %v1699 = vmul.f32 %v1691, 0.25
    %v1700 = vmul.f32 %v1692, 0.25
    %v1701 = vmul.f32 %v1693, 0.25
    %v1702 = vmul.f32 %v1694, 0.25
    %v1703 = vmul.f32 %v1049, %v1209
    %v1704 = vmul.f32 %v1069, %v1229
    %v1705 = vmul.f32 %v1089, %v1249
    %v1706 = vmul.f32 %v1109, %v1269
    %v1707 = vmul.f32 %v1129, %v1289
    %v1708 = vmul.f32 %v1149, %v1309
    %v1709 = vmul.f32 %v1169, %v1329
    %v1710 = vmul.f32 %v1189, %v1349
    %v1711 = vsub.f32 %v1695, %v1703
    %v1712 = vsub.f32 %v1696, %v1704
    %v1713 = vsub.f32 %v1697, %v1705
    %v1714 = vsub.f32 %v1698, %v1706
    %v1715 = vsub.f32 %v1699, %v1707
    %v1716 = vsub.f32 %v1700, %v1708
    %v1717 = vsub.f32 %v1701, %v1709
    %v1718 = vsub.f32 %v1702, %v1710
    %v1719 = vadd.f32 %v1369, %v1529
    %v1720 = vadd.f32 %v1389, %v1549
    %v1721 = vadd.f32 %v1409, %v1569
    %v1722 = vadd.f32 %v1429, %v1589
    %v1723 = vadd.f32 %v1449, %v1609
    %v1724 = vadd.f32 %v1469, %v1629
    %v1725 = vadd.f32 %v1489, %v1649
    %v1726 = vadd.f32 %v1509, %v1669
    %v1727 = vmul.f32 %v1719, 0.5
    %v1728 = vmul.f32 %v1720, 0.5
    %v1729 = vmul.f32 %v1721, 0.5
    %v1730 = vmul.f32 %v1722, 0.5
    %v1731 = vmul.f32 %v1723, 0.5
    %v1732 = vmul.f32 %v1724, 0.5
    %v1733 = vmul.f32 %v1725, 0.5
    %v1734 = vmul.f32 %v1726, 0.5
    %v1735 = vmul.f32 %v1049, %v1049
    %v1736 = vmul.f32 %v1069, %v1069
    %v1737 = vmul.f32 %v1089, %v1089
    %v1738 = vmul.f32 %v1109, %v1109
    %v1739 = vmul.f32 %v1129, %v1129
    %v1740 = vmul.f32 %v1149, %v1149
    %v1741 = vmul.f32 %v1169, %v1169
    %v1742 = vmul.f32 %v1189, %v1189
    %v1743 = vsub.f32 %v1727, %v1735
    %v1744 = vsub.f32 %v1728, %v1736
    %v1745 = vsub.f32 %v1729, %v1737
    %v1746 = vsub.f32 %v1730, %v1738
    %v1747 = vsub.f32 %v1731, %v1739
    %v1748 = vsub.f32 %v1732, %v1740
    %v1749 = vsub.f32 %v1733, %v1741
    %v1750 = vsub.f32 %v1734, %v1742
    %v1751 = vmul.f32 %v1209, %v1209
    %v1752 = vmul.f32 %v1229, %v1229
    %v1753 = vmul.f32 %v1249, %v1249
    %v1754 = vmul.f32 %v1269, %v1269
    %v1755 = vmul.f32 %v1289, %v1289
    %v1756 = vmul.f32 %v1309, %v1309
    %v1757 = vmul.f32 %v1329, %v1329
    %v1758 = vmul.f32 %v1349, %v1349
    %v1759 = vsub.f32 %v1743, %v1751
    %v1760 = vsub.f32 %v1744, %v1752
    %v1761 = vsub.f32 %v1745, %v1753
    %v1762 = vsub.f32 %v1746, %v1754
    %v1763 = vsub.f32 %v1747, %v1755
    %v1764 = vsub.f32 %v1748, %v1756
    %v1765 = vsub.f32 %v1749, %v1757
    %v1766 = vsub.f32 %v1750, %v1758
    %v1767 = vmul.f32 %v1671, 2.0
    %v1768 = vmul.f32 %v1672, 2.0
    %v1769 = vmul.f32 %v1673, 2.0
    %v1770 = vmul.f32 %v1674, 2.0
    %v1771 = vmul.f32 %v1675, 2.0
    %v1772 = vmul.f32 %v1676, 2.0
    %v1773 = vmul.f32 %v1677, 2.0
    %v1774 = vmul.f32 %v1678, 2.0
    %v1775 = vmul.f32 %v1767, %v1679
    %v1776 = vmul.f32 %v1768, %v1680
    %v1777 = vmul.f32 %v1769, %v1681
    %v1778 = vmul.f32 %v1770, %v1682
    %v1779 = vmul.f32 %v1771, %v1683
    %v1780 = vmul.f32 %v1772, %v1684
    %v1781 = vmul.f32 %v1773, %v1685
    %v1782 = vmul.f32 %v1774, %v1686
    %v1783 = vadd.f32 %v1775, 0.0001
    %v1784 = vadd.f32 %v1776, 0.0001
    %v1785 = vadd.f32 %v1777, 0.0001
    %v1786 = vadd.f32 %v1778, 0.0001
    %v1787 = vadd.f32 %v1779, 0.0001
    %v1788 = vadd.f32 %v1780, 0.0001
    %v1789 = vadd.f32 %v1781, 0.0001
    %v1790 = vadd.f32 %v1782, 0.0001
    %v1791 = vmul.f32 %v1711, 2.0
    %v1792 = vmul.f32 %v1712, 2.0
    %v1793 = vmul.f32 %v1713, 2.0
    %v1794 = vmul.f32 %v1714, 2.0
    %v1795 = vmul.f32 %v1715, 2.0
    %v1796 = vmul.f32 %v1716, 2.0
    %v1797 = vmul.f32 %v1717, 2.0
    %v1798 = vmul.f32 %v1718, 2.0
    %v1799 = vadd.f32 %v1791, 0.0009
    %v1800 = vadd.f32 %v1792, 0.0009
    %v1801 = vadd.f32 %v1793, 0.0009
    %v1802 = vadd.f32 %v1794, 0.0009
    %v1803 = vadd.f32 %v1795, 0.0009
    %v1804 = vadd.f32 %v1796, 0.0009
    %v1805 = vadd.f32 %v1797, 0.0009
    %v1806 = vadd.f32 %v1798, 0.0009
    %v1807 = vmul.f32 %v1783, %v1799
    %v1808 = vmul.f32 %v1784, %v1800
    %v1809 = vmul.f32 %v1785, %v1801
    %v1810 = vmul.f32 %v1786, %v1802
    %v1811 = vmul.f32 %v1787, %v1803
    %v1812 = vmul.f32 %v1788, %v1804
    %v1813 = vmul.f32 %v1789, %v1805
    %v1814 = vmul.f32 %v1790, %v1806
    %v1815 = vmul.f32 %v1671, %v1671
    %v1816 = vmul.f32 %v1672, %v1672
    %v1817 = vmul.f32 %v1673, %v1673
    %v1818 = vmul.f32 %v1674, %v1674
    %v1819 = vmul.f32 %v1675, %v1675
    %v1820 = vmul.f32 %v1676, %v1676
    %v1821 = vmul.f32 %v1677, %v1677
    %v1822 = vmul.f32 %v1678, %v1678
    %v1823 = vmul.f32 %v1679, %v1679
    %v1824 = vmul.f32 %v1680, %v1680
    %v1825 = vmul.f32 %v1681, %v1681
    %v1826 = vmul.f32 %v1682, %v1682
    %v1827 = vmul.f32 %v1683, %v1683
    %v1828 = vmul.f32 %v1684, %v1684
    %v1829 = vmul.f32 %v1685, %v1685
    %v1830 = vmul.f32 %v1686, %v1686
    %v1831 = vadd.f32 %v1815, %v1823
    %v1832 = vadd.f32 %v1816, %v1824
    %v1833 = vadd.f32 %v1817, %v1825
    %v1834 = vadd.f32 %v1818, %v1826
    %v1835 = vadd.f32 %v1819, %v1827
    %v1836 = vadd.f32 %v1820, %v1828
    %v1837 = vadd.f32 %v1821, %v1829
    %v1838 = vadd.f32 %v1822, %v1830
    %v1839 = vadd.f32 %v1831, 0.0001
    %v1840 = vadd.f32 %v1832, 0.0001
    %v1841 = vadd.f32 %v1833, 0.0001
    %v1842 = vadd.f32 %v1834, 0.0001
    %v1843 = vadd.f32 %v1835, 0.0001
    %v1844 = vadd.f32 %v1836, 0.0001
    %v1845 = vadd.f32 %v1837, 0.0001
    %v1846 = vadd.f32 %v1838, 0.0001
    %v1847 = vadd.f32 %v1759, 0.0009
    %v1848 = vadd.f32 %v1760, 0.0009
    %v1849 = vadd.f32 %v1761, 0.0009
    %v1850 = vadd.f32 %v1762, 0.0009
    %v1851 = vadd.f32 %v1763, 0.0009
    %v1852 = vadd.f32 %v1764, 0.0009
    %v1853 = vadd.f32 %v1765, 0.0009
    %v1854 = vadd.f32 %v1766, 0.0009
    %v1855 = vmul.f32 %v1839, %v1847
    %v1856 = vmul.f32 %v1840, %v1848
    %v1857 = vmul.f32 %v1841, %v1849
    %v1858 = vmul.f32 %v1842, %v1850
    %v1859 = vmul.f32 %v1843, %v1851
    %v1860 = vmul.f32 %v1844, %v1852
    %v1861 = vmul.f32 %v1845, %v1853
    %v1862 = vmul.f32 %v1846, %v1854
    %v1863 = vrcp.pop %v1855
    %v1864 = vrcp.pop %v1856
    %v1865 = vrcp.pop %v1857
    %v1866 = vrcp.pop %v1858
    %v1867 = vrcp.pop %v1859
    %v1868 = vrcp.pop %v1860
    %v1869 = vrcp.pop %v1861
    %v1870 = vrcp.pop %v1862
    %v1871 = vmul.f32 %v1855, %v1863
    %v1872 = vmul.f32 %v1856, %v1864
    %v1873 = vmul.f32 %v1857, %v1865
    %v1874 = vmul.f32 %v1858, %v1866
    %v1875 = vmul.f32 %v1859, %v1867
    %v1876 = vmul.f32 %v1860, %v1868
    %v1877 = vmul.f32 %v1861, %v1869
    %v1878 = vmul.f32 %v1862, %v1870
    %v1879 = vsub.f32 2.0, %v1871
    %v1880 = vsub.f32 2.0, %v1872
    %v1881 = vsub.f32 2.0, %v1873
    %v1882 = vsub.f32 2.0, %v1874
    %v1883 = vsub.f32 2.0, %v1875
    %v1884 = vsub.f32 2.0, %v1876
    %v1885 = vsub.f32 2.0, %v1877
    %v1886 = vsub.f32 2.0, %v1878
    %v1887 = vmul.f32 %v1863, %v1879
    %v1888 = vmul.f32 %v1864, %v1880
    %v1889 = vmul.f32 %v1865, %v1881
    %v1890 = vmul.f32 %v1866, %v1882
    %v1891 = vmul.f32 %v1867, %v1883
    %v1892 = vmul.f32 %v1868, %v1884
    %v1893 = vmul.f32 %v1869, %v1885
    %v1894 = vmul.f32 %v1870, %v1886
    %v1895 = vmul.f32 %v1855, %v1887
    %v1896 = vmul.f32 %v1856, %v1888
    %v1897 = vmul.f32 %v1857, %v1889
    %v1898 = vmul.f32 %v1858, %v1890
    %v1899 = vmul.f32 %v1859, %v1891
    %v1900 = vmul.f32 %v1860, %v1892
    %v1901 = vmul.f32 %v1861, %v1893
    %v1902 = vmul.f32 %v1862, %v1894
    %v1903 = vsub.f32 2.0, %v1895
    %v1904 = vsub.f32 2.0, %v1896
    %v1905 = vsub.f32 2.0, %v1897
    %v1906 = vsub.f32 2.0, %v1898
    %v1907 = vsub.f32 2.0, %v1899
    %v1908 = vsub.f32 2.0, %v1900
    %v1909 = vsub.f32 2.0, %v1901
    %v1910 = vsub.f32 2.0, %v1902
    %v1911 = vmul.f32 %v1887, %v1903
    %v1912 = vmul.f32 %v1888, %v1904
    %v1913 = vmul.f32 %v1889, %v1905
    %v1914 = vmul.f32 %v1890, %v1906
    %v1915 = vmul.f32 %v1891, %v1907
    %v1916 = vmul.f32 %v1892, %v1908
    %v1917 = vmul.f32 %v1893, %v1909
    %v1918 = vmul.f32 %v1894, %v1910
    %v1919 = vmul.f32 %v1807, %v1911
    %v1920 = vmul.f32 %v1808, %v1912
    %v1921 = vmul.f32 %v1809, %v1913
    %v1922 = vmul.f32 %v1810, %v1914
    %v1923 = vmul.f32 %v1811, %v1915
    %v1924 = vmul.f32 %v1812, %v1916
    %v1925 = vmul.f32 %v1813, %v1917
    %v1926 = vmul.f32 %v1814, %v1918
    %v1927 = vlaneseq
    %v1928 = vand.u32 %v1927, 127
    %vm1929 = vcmp.lt.s32.totalorder %v1928, 6
    %v1930 = vsel %vm1929, %v1919, 0.0
    %vm1931 = vcmask 1045504
    %v1932 = vsel %vm1931, %v1930, 0.0
    %1933 = vadd.xlane.f32.xlu0 %v1932
    %v1934 = vpop.xlane.xlu0 %1933
    %v1935 = vrot.slane %v1934, 4
    %v1936 = vadd.f32 %v1934, %v1935
    %v1937 = vrot.slane %v1936, 2
    %v1938 = vadd.f32 %v1936, %v1937
    %v1939 = vrot.slane %v1938, 1
    %v1940 = vadd.f32 %v1938, %v1939
    %s1941 = vtos %v1940
    %v1942 = vstv %s1941
    %v1943 = vmul.f32 %v1942, 0.027777778
    %v1944 = vmax.f32 %v1943, 0.0
    %v1945 = vadd.f32 %v1944, 0.0
    %v1946 = vsel %vm1929, %v1920, 0.0
    %v1947 = vsel %vm1931, %v1946, 0.0
    %1948 = vadd.xlane.f32.xlu0 %v1947
    %v1949 = vpop.xlane.xlu0 %1948
    %v1950 = vrot.slane %v1949, 4
    %v1951 = vadd.f32 %v1949, %v1950
    %v1952 = vrot.slane %v1951, 2
    %v1953 = vadd.f32 %v1951, %v1952
    %v1954 = vrot.slane %v1953, 1
    %v1955 = vadd.f32 %v1953, %v1954
    %s1956 = vtos %v1955
    %v1957 = vstv %s1956
    %v1958 = vmul.f32 %v1957, 0.027777778
    %v1959 = vmax.f32 %v1958, 0.0
    %v1960 = vadd.f32 %v1945, %v1959
    %v1961 = vsel %vm1929, %v1921, 0.0
    %v1962 = vsel %vm1931, %v1961, 0.0
    %1963 = vadd.xlane.f32.xlu0 %v1962
    %v1964 = vpop.xlane.xlu0 %1963
    %v1965 = vrot.slane %v1964, 4
    %v1966 = vadd.f32 %v1964, %v1965
    %v1967 = vrot.slane %v1966, 2
    %v1968 = vadd.f32 %v1966, %v1967
    %v1969 = vrot.slane %v1968, 1
    %v1970 = vadd.f32 %v1968, %v1969
    %s1971 = vtos %v1970
    %v1972 = vstv %s1971
    %v1973 = vmul.f32 %v1972, 0.027777778
    %v1974 = vmax.f32 %v1973, 0.0
    %v1975 = vadd.f32 %v1960, %v1974
    %v1976 = vsel %vm1929, %v1922, 0.0
    %v1977 = vsel %vm1931, %v1976, 0.0
    %1978 = vadd.xlane.f32.xlu0 %v1977
    %v1979 = vpop.xlane.xlu0 %1978
    %v1980 = vrot.slane %v1979, 4
    %v1981 = vadd.f32 %v1979, %v1980
    %v1982 = vrot.slane %v1981, 2
    %v1983 = vadd.f32 %v1981, %v1982
    %v1984 = vrot.slane %v1983, 1
    %v1985 = vadd.f32 %v1983, %v1984
    %s1986 = vtos %v1985
    %v1987 = vstv %s1986
    %v1988 = vmul.f32 %v1987, 0.027777778
    %v1989 = vmax.f32 %v1988, 0.0
    %v1990 = vadd.f32 %v1975, %v1989
    %v1991 = vsel %vm1929, %v1923, 0.0
    %v1992 = vsel %vm1931, %v1991, 0.0
    %1993 = vadd.xlane.f32.xlu0 %v1992
    %v1994 = vpop.xlane.xlu0 %1993
    %v1995 = vrot.slane %v1994, 4
    %v1996 = vadd.f32 %v1994, %v1995
    %v1997 = vrot.slane %v1996, 2
    %v1998 = vadd.f32 %v1996, %v1997
    %v1999 = vrot.slane %v1998, 1
    %v2000 = vadd.f32 %v1998, %v1999
    %s2001 = vtos %v2000
    %v2002 = vstv %s2001
    %v2003 = vmul.f32 %v2002, 0.027777778
    %v2004 = vmax.f32 %v2003, 0.0
    %v2005 = vadd.f32 %v1990, %v2004
    %v2006 = vsel %vm1929, %v1924, 0.0
    %v2007 = vsel %vm1931, %v2006, 0.0
    %2008 = vadd.xlane.f32.xlu0 %v2007
    %v2009 = vpop.xlane.xlu0 %2008
    %v2010 = vrot.slane %v2009, 4
    %v2011 = vadd.f32 %v2009, %v2010
    %v2012 = vrot.slane %v2011, 2
    %v2013 = vadd.f32 %v2011, %v2012
    %v2014 = vrot.slane %v2013, 1
    %v2015 = vadd.f32 %v2013, %v2014
    %s2016 = vtos %v2015
    %v2017 = vstv %s2016
    %v2018 = vmul.f32 %v2017, 0.027777778
    %v2019 = vmax.f32 %v2018, 0.0
    %v2020 = vadd.f32 %v2005, %v2019
    %v2021 = vsel %vm1929, %v1925, 0.0
    %v2022 = vsel %vm1931, %v2021, 0.0
    %2023 = vadd.xlane.f32.xlu0 %v2022
    %v2024 = vpop.xlane.xlu0 %2023
    %v2025 = vrot.slane %v2024, 4
    %v2026 = vadd.f32 %v2024, %v2025
    %v2027 = vrot.slane %v2026, 2
    %v2028 = vadd.f32 %v2026, %v2027
    %v2029 = vrot.slane %v2028, 1
    %v2030 = vadd.f32 %v2028, %v2029
    %s2031 = vtos %v2030
    %v2032 = vstv %s2031
    %v2033 = vmul.f32 %v2032, 0.027777778
    %v2034 = vmax.f32 %v2033, 0.0
    %v2035 = vadd.f32 %v2020, %v2034
    %v2036 = vsel %vm1929, %v1926, 0.0
    %v2037 = vsel %vm1931, %v2036, 0.0
    %2038 = vadd.xlane.f32.xlu0 %v2037
    %v2039 = vpop.xlane.xlu0 %2038
    %v2040 = vrot.slane %v2039, 4
    %v2041 = vadd.f32 %v2039, %v2040
    %v2042 = vrot.slane %v2041, 2
    %v2043 = vadd.f32 %v2041, %v2042
    %v2044 = vrot.slane %v2043, 1
    %v2045 = vadd.f32 %v2043, %v2044
    %s2046 = vtos %v2045
    %v2047 = vstv %s2046
    %v2048 = vmul.f32 %v2047, 0.027777778
    %v2049 = vmax.f32 %v2048, 0.0
    %v2050 = vadd.f32 %v2035, %v2049
    %v2051 = vlaneseq
    %v2052 = vshrl.u32 %v2051, 7
    %vm2053 = vcmp.eq.s32.totalorder %v2052, 0
    %vm2054 = vcmp.eq.s32.totalorder %v1928, 0
    %vm2055 = vmand %vm2053, %vm2054
    %v2056 = vstv %s471
    %v2057 = vsel %vm2055, %v2056, 0.0
    %vm2058 = vcmp.eq.s32.totalorder %v1928, 1
    %vm2059 = vmand %vm2053, %vm2058
    %v2060 = vstv %s527
    %v2061 = vsel %vm2059, %v2060, 0.0
    %v2062 = vadd.f32 %v2057, %v2061
    %vm2063 = vcmp.eq.s32.totalorder %v1928, 2
    %vm2064 = vmand %vm2053, %vm2063
    %v2065 = vsel %vm2064, %v2050, 0.0
    %v2066 = vadd.f32 %v2062, %v2065
    %2067 = vst [vmem:[#allocation10] sm:$0xff] %v2066
    // Predicated region
    $region34: #{tpu_custom_call.1} parent=1 // pred_check
      _
    $region35: #{tpu_custom_call.1} parent=1 // pred_check_branch
      %2069 = sbr.rel (0) target = $region37
    $region36: #{tpu_custom_call.1} parent=1 // pred_region
      %2071 = vsyncadd [#allocation4], 0
      %s2073 = sshll.u32 [#allocation10], 4
      %s2074 = int_to_ptr.vmem [resolvable:$true] %s2073
      %s2075 = sshll.u32 %s4, 4
      %s2076 = int_to_ptr.hbm [resolvable:$true] %s2075
      %2078 = dma.vmem_to_hbm [thread:$0]  %s2074, 128, %s2076, [#allocation4]
    $region37: #{tpu_custom_call.1} parent=1 // pred_fallthru
      _
    // Predicated region
    $region38: #{tpu_custom_call.1} parent=1 // pred_check
      _
    $region39: #{tpu_custom_call.1} parent=1 // pred_check_branch
      %2080 = sbr.rel (0) target = $region41
    $region40: #{tpu_custom_call.1} parent=1 // pred_region
      %2082 = dma.done [#allocation4], 128
    $region41: #{tpu_custom_call.1} parent=1 // pred_fallthru
      _
    %2083 = vsyncpa [#allocation3], 1
    %2084 = vsyncpa [#allocation6], 1
    %2085 = vsyncpa [#allocation9], 1
    %2086 = vsyncpa [#allocation4], 1

</llo_original>
